<compile_context>
chip_gen: v6e
topology: v6e:2x2x1
jax: 0.10.0
libtpu: 0.0.40
codegen_flags: <defaults>
</compile_context>

<pallas_src>
import numpy as np
import jax
import jax.numpy as jnp
from jax.experimental import pallas as pl
from jax.experimental.pallas import tpu as pltpu


# ----------------------------------------------------------------------------
# Fused per-image conv2d kernel (per-image bias flag and W / |W| selection)
# ----------------------------------------------------------------------------
def _conv2d_fused(x, weight, bias, bias_flag, w_sel, stride, padding):
    """Applies conv2d image-by-image with per-image bias / weight selection.

    x         : (N, Cin, H, W)   stack of images (c rows / idep rows / edep rows)
    weight    : (Cout, Cin, KH, KW)
    bias      : (Cout,) or None
    bias_flag : (N,) int32  -- 1: add bias, 0: no bias
    w_sel     : (N,) int32  -- 0: use W,    1: use |W|
    """
    N, Cin, H, W = x.shape
    Cout, Cin_w, KH, KW = weight.shape
    assert Cin_w == Cin
    sh, sw = (stride, stride) if isinstance(stride, int) else tuple(stride)
    ph, pw = (padding, padding) if isinstance(padding, int) else tuple(padding)

    Hp, Wp = H + 2 * ph, W + 2 * pw
    OHd, OWd = Hp - KH + 1, Wp - KW + 1          # dense (stride-1) output extents
    L = (OHd - 1) * Wp + OWd                     # valid flat span in padded-row coords

    # Pad + flatten spatial dims.  In this layout the conv is, for each kernel
    # tap (kh, kw), a (Cout,Cin) x (Cin,L) matmul against a *contiguous* slice
    # of the flattened padded image, accumulated over the KH*KW taps.
    x_flat = jnp.pad(x, ((0, 0), (0, 0), (ph, ph), (pw, pw))).reshape(N, Cin, Hp * Wp)

    # Tap-major weights: w_r[kh*KW + kw, co, ci] = weight[co, ci, kh, kw].
    # Stack [W, |W|] so the per-image selector can pick either via index_map.
    w_r = jnp.transpose(weight, (2, 3, 0, 1)).reshape(KH * KW, Cout, Cin)
    w_stack = jnp.stack([w_r, jnp.abs(w_r)], axis=0)

    if bias is None:
        bias = jnp.zeros((Cout,), x.dtype)
    b_r = bias.reshape(Cout, 1).astype(jnp.float32)

    def kernel(flag_ref, sel_ref, x_ref, w_ref, b_ref, o_ref):
        # x_ref: (Cin, Hp*Wp)   w_ref: (KH*KW, Cout, Cin)
        # b_ref: (Cout, 1)      o_ref: (Cout, L)
        n = pl.program_id(0)
        acc = jnp.zeros((Cout, L), jnp.float32)
        for k in range(KH * KW):                       # static, unrolled taps
            off = (k // KW) * Wp + (k % KW)
            acc = acc + jnp.dot(w_ref[k], x_ref[:, off:off + L],
                                preferred_element_type=jnp.float32)
        # per-image bias (only the center rows get it)
        acc = acc + b_ref[...] * flag_ref[n].astype(jnp.float32)
        o_ref[...] = acc.astype(o_ref.dtype)

    out_flat = pl.pallas_call(
        kernel,
        out_shape=jax.ShapeDtypeStruct((N, Cout, L), x.dtype),
        grid_spec=pltpu.PrefetchScalarGridSpec(
            num_scalar_prefetch=2,                    # bias_flag, w_sel in SMEM
            grid=(N,),
            in_specs=[
                pl.BlockSpec((None, Cin, Hp * Wp),
                             lambda n, flag, sel: (n, 0, 0)),
                pl.BlockSpec((None, KH * KW, Cout, Cin),
                             lambda n, flag, sel: (sel[n], 0, 0, 0)),
                pl.BlockSpec((Cout, 1),
                             lambda n, flag, sel: (0, 0)),
            ],
            out_specs=pl.BlockSpec((None, Cout, L),
                                   lambda n, flag, sel: (n, 0, 0)),
        ),
        compiler_params=pltpu.CompilerParams(
            dimension_semantics=("parallel",)),
    )(bias_flag.astype(jnp.int32), w_sel.astype(jnp.int32),
      x_flat, w_stack, b_r)

    # flat dense output -> (N, Cout, OHd, Wp); subsample by stride and crop the
    # (Wp - OWd) wrap-around garbage columns per row.
    # TODO(synk): for stride > 1 the dense result is computed then subsampled
    # (correct but wasteful by a factor of stride^2).
    out_dense = jnp.pad(out_flat, ((0, 0), (0, 0), (0, OHd * Wp - L)))
    out_dense = out_dense.reshape(N, Cout, OHd, Wp)
    return out_dense[:, :, ::sh, :OWd:sw]


# ----------------------------------------------------------------------------
# Interval_Conv2d branches
# ----------------------------------------------------------------------------
def interval_conv2d_symbolic(c, idep, edep_list, weight, bias,
                             stride=1, padding=0):
    """Symbolic_interval branch: conv W applied to c (+bias), idep, edep[i]."""
    parts = [c, idep] + list(edep_list)
    counts = [int(p.shape[0]) for p in parts]
    x_all = jnp.concatenate(parts, axis=0)
    n_total = x_all.shape[0]
    flags = jnp.concatenate([jnp.ones((counts[0],), jnp.int32),
                             jnp.zeros((n_total - counts[0],), jnp.int32)])
    w_sel = jnp.zeros((n_total,), jnp.int32)          # all use W (no abs)
    out = _conv2d_fused(x_all, weight, bias, flags, w_sel, stride, padding)
    offs = np.cumsum([0] + counts)
    c_out = out[offs[0]:offs[1]]
    idep_out = out[offs[1]:offs[2]]
    edep_out = [out[offs[i]:offs[i + 1]] for i in range(2, len(counts))]
    # TODO(synk): the Symbolic_interval bookkeeping (shrink()/concretize(),
    # ix.shape / ix.n updates) lives in the interval container class, not here.
    return c_out, idep_out, edep_out


def interval_conv2d_plain(c, e, weight, bias, stride=1, padding=0):
    """Interval branch: c -> conv(c, W)+bias, e -> conv(e, |W|). Returns (c', e')."""
    B, M = int(c.shape[0]), int(e.shape[0])
    x_all = jnp.concatenate([c, e], axis=0)
    flags = jnp.concatenate([jnp.ones((B,), jnp.int32),
                             jnp.zeros((M,), jnp.int32)])
    w_sel = jnp.concatenate([jnp.zeros((B,), jnp.int32),
                             jnp.ones((M,), jnp.int32)])
    out = _conv2d_fused(x_all, weight, bias, flags, w_sel, stride, padding)
    return out[:B], out[B:]                            # caller: update_lu(c-e, c+e)


# ----------------------------------------------------------------------------
# Pure-JAX reference (mirrors F.conv2d)
# ----------------------------------------------------------------------------
def _conv_ref(x, w, b, stride, padding):
    sh, sw = (stride, stride) if isinstance(stride, int) else tuple(stride)
    ph, pw = (padding, padding) if isinstance(padding, int) else tuple(padding)
    out = jax.lax.conv_general_dilated(
        x, w, window_strides=(sh, sw), padding=((ph, ph), (pw, pw)),
        dimension_numbers=("NCHW", "OIHW", "NCHW"),
        precision=jax.lax.Precision.HIGHEST)
    if b is not None:
        out = out + b.reshape(1, -1, 1, 1)
    return out


if __name__ == "__main__":
    key = jax.random.PRNGKey(0)
    k = jax.random.split(key, 8)

    B, Cin, Cout, H, W, KH, KW = 2, 4, 8, 16, 16, 3, 3
    stride, padding = 1, 1
    Kdep, M1, M2 = 8, 4, 6      # symbolic input-dep maps / error-row counts

    weight = 0.2 * jax.random.normal(k[0], (Cout, Cin, KH, KW), jnp.float32)
    bias = 0.1 * jax.random.normal(k[1], (Cout,), jnp.float32)
    c = jax.random.normal(k[2], (B, Cin, H, W), jnp.float32)
    idep = jax.random.normal(k[3], (B * Kdep, Cin, H, W), jnp.float32)
    edep = [jax.random.normal(k[4], (M1, Cin, H, W), jnp.float32),
            jax.random.normal(k[5], (M2, Cin, H, W), jnp.float32)]

    # ---- Symbolic_interval branch ------------------------------------------
    c_out, idep_out, edep_out = interval_conv2d_symbolic(
        c, idep, edep, weight, bias, stride, padding)
    jax.block_until_ready(c_out)
    jax.block_until_ready(idep_out)
    for eo in edep_out:
        jax.block_until_ready(eo)

    np.testing.assert_allclose(
        np.asarray(c_out), np.asarray(_conv_ref(c, weight, bias, stride, padding)),
        rtol=1e-4, atol=1e-4)
    np.testing.assert_allclose(
        np.asarray(idep_out), np.asarray(_conv_ref(idep, weight, None, stride, padding)),
        rtol=1e-4, atol=1e-4)
    for eo, ei in zip(edep_out, edep):
        np.testing.assert_allclose(
            np.asarray(eo), np.asarray(_conv_ref(ei, weight, None, stride, padding)),
            rtol=1e-4, atol=1e-4)

    # ---- plain Interval branch:  update_lu(c - e, c + e) --------------------
    e = jnp.abs(jax.random.normal(k[6], (B, Cin, H, W), jnp.float32))
    c2, e2 = interval_conv2d_plain(c, e, weight, bias, stride, padding)
    jax.block_until_ready(c2)
    jax.block_until_ready(e2)
    np.testing.assert_allclose(
        np.asarray(c2), np.asarray(_conv_ref(c, weight, bias, stride, padding)),
        rtol=1e-4, atol=1e-4)
    np.testing.assert_allclose(
        np.asarray(e2), np.asarray(_conv_ref(e, jnp.abs(weight), None, stride, padding)),
        rtol=1e-4, atol=1e-4)
    lower, upper = c2 - e2, c2 + e2
    assert bool(jnp.all(upper >= lower - 1e-6))

    print("KERNEL_OK")
</pallas_src>

<mosaic_0001>
module attributes {stable_mosaic.version = 11 : i64} {
  func.func @kernel(%arg0: i32, %arg1: memref<28xi32, #tpu.memory_space<smem>>, %arg2: memref<28xi32, #tpu.memory_space<smem>>, %arg3: memref<1x4x324xf32, #tpu.memory_space<vmem>>, %arg4: memref<1x9x8x4xf32, #tpu.memory_space<vmem>>, %arg5: memref<8x1xf32, #tpu.memory_space<vmem>>, %arg6: memref<1x8x286xf32, #tpu.memory_space<vmem>>) attributes {dimension_semantics = [#tpu.dimension_semantics<parallel>], iteration_bounds = array<i64: 28>, scalar_prefetch = 2 : i64, scratch_operands = 0 : i64, tpu.core_type = #tpu.core_type<tc>, window_params = [{transform_indices = @transform_0, window_bounds = array<i64: 1, 4, 324>}, {transform_indices = @transform_1, window_bounds = array<i64: 1, 9, 8, 4>}, {pipeline_mode = #tpu.pipeline_mode<synchronous>, transform_indices = @transform_2, window_bounds = array<i64: 8, 1>}, {transform_indices = @transform_3, window_bounds = array<i64: 1, 8, 286>}]} {
    %cst = arith.constant 0.000000e+00 : f32
    %0 = vector.broadcast %cst : f32 to vector<8x286xf32>
    %c0 = arith.constant 0 : index
    %c0_0 = arith.constant 0 : index
    %c0_1 = arith.constant 0 : index
    %c0_2 = arith.constant 0 : index
    %1 = vector.load %arg4[%c0, %c0_0, %c0_1, %c0_2] : memref<1x9x8x4xf32, #tpu.memory_space<vmem>>, vector<1x1x8x4xf32>
    %2 = vector.shape_cast %1 : vector<1x1x8x4xf32> to vector<8x4xf32>
    %c0_3 = arith.constant 0 : index
    %c0_4 = arith.constant 0 : index
    %c0_5 = arith.constant 0 : index
    %3 = vector.load %arg3[%c0_3, %c0_4, %c0_5] : memref<1x4x324xf32, #tpu.memory_space<vmem>>, vector<1x4x286xf32>
    %4 = vector.shape_cast %3 : vector<1x4x286xf32> to vector<4x286xf32>
    %cst_6 = arith.constant dense<0.000000e+00> : vector<8x286xf32>
    %5 = tpu.matmul %2, %4, %cst_6 {dimension_numbers = #tpu.dot_dimension_numbers<[1], [0], [0], [1], [0, 0, 1, 1], [], []>} : vector<8x4xf32>, vector<4x286xf32>, vector<8x286xf32> -> vector<8x286xf32>
    %6 = arith.addf %0, %5 : vector<8x286xf32>
    %c0_7 = arith.constant 0 : index
    %c1 = arith.constant 1 : index
    %c0_8 = arith.constant 0 : index
    %c0_9 = arith.constant 0 : index
    %7 = vector.load %arg4[%c0_7, %c1, %c0_8, %c0_9] : memref<1x9x8x4xf32, #tpu.memory_space<vmem>>, vector<1x1x8x4xf32>
    %8 = vector.shape_cast %7 : vector<1x1x8x4xf32> to vector<8x4xf32>
    %c0_10 = arith.constant 0 : index
    %c0_11 = arith.constant 0 : index
    %c1_12 = arith.constant 1 : index
    %9 = vector.load %arg3[%c0_10, %c0_11, %c1_12] : memref<1x4x324xf32, #tpu.memory_space<vmem>>, vector<1x4x286xf32>
    %10 = vector.shape_cast %9 : vector<1x4x286xf32> to vector<4x286xf32>
    %cst_13 = arith.constant dense<0.000000e+00> : vector<8x286xf32>
    %11 = tpu.matmul %8, %10, %cst_13 {dimension_numbers = #tpu.dot_dimension_numbers<[1], [0], [0], [1], [0, 0, 1, 1], [], []>} : vector<8x4xf32>, vector<4x286xf32>, vector<8x286xf32> -> vector<8x286xf32>
    %12 = arith.addf %6, %11 : vector<8x286xf32>
    %c0_14 = arith.constant 0 : index
    %c2 = arith.constant 2 : index
    %c0_15 = arith.constant 0 : index
    %c0_16 = arith.constant 0 : index
    %13 = vector.load %arg4[%c0_14, %c2, %c0_15, %c0_16] : memref<1x9x8x4xf32, #tpu.memory_space<vmem>>, vector<1x1x8x4xf32>
    %14 = vector.shape_cast %13 : vector<1x1x8x4xf32> to vector<8x4xf32>
    %c0_17 = arith.constant 0 : index
    %c0_18 = arith.constant 0 : index
    %c2_19 = arith.constant 2 : index
    %15 = vector.load %arg3[%c0_17, %c0_18, %c2_19] : memref<1x4x324xf32, #tpu.memory_space<vmem>>, vector<1x4x286xf32>
    %16 = vector.shape_cast %15 : vector<1x4x286xf32> to vector<4x286xf32>
    %cst_20 = arith.constant dense<0.000000e+00> : vector<8x286xf32>
    %17 = tpu.matmul %14, %16, %cst_20 {dimension_numbers = #tpu.dot_dimension_numbers<[1], [0], [0], [1], [0, 0, 1, 1], [], []>} : vector<8x4xf32>, vector<4x286xf32>, vector<8x286xf32> -> vector<8x286xf32>
    %18 = arith.addf %12, %17 : vector<8x286xf32>
    %c0_21 = arith.constant 0 : index
    %c3 = arith.constant 3 : index
    %c0_22 = arith.constant 0 : index
    %c0_23 = arith.constant 0 : index
    %19 = vector.load %arg4[%c0_21, %c3, %c0_22, %c0_23] : memref<1x9x8x4xf32, #tpu.memory_space<vmem>>, vector<1x1x8x4xf32>
    %20 = vector.shape_cast %19 : vector<1x1x8x4xf32> to vector<8x4xf32>
    %c0_24 = arith.constant 0 : index
    %c0_25 = arith.constant 0 : index
    %c18 = arith.constant 18 : index
    %21 = vector.load %arg3[%c0_24, %c0_25, %c18] : memref<1x4x324xf32, #tpu.memory_space<vmem>>, vector<1x4x286xf32>
    %22 = vector.shape_cast %21 : vector<1x4x286xf32> to vector<4x286xf32>
    %cst_26 = arith.constant dense<0.000000e+00> : vector<8x286xf32>
    %23 = tpu.matmul %20, %22, %cst_26 {dimension_numbers = #tpu.dot_dimension_numbers<[1], [0], [0], [1], [0, 0, 1, 1], [], []>} : vector<8x4xf32>, vector<4x286xf32>, vector<8x286xf32> -> vector<8x286xf32>
    %24 = arith.addf %18, %23 : vector<8x286xf32>
    %c0_27 = arith.constant 0 : index
    %c4 = arith.constant 4 : index
    %c0_28 = arith.constant 0 : index
    %c0_29 = arith.constant 0 : index
    %25 = vector.load %arg4[%c0_27, %c4, %c0_28, %c0_29] : memref<1x9x8x4xf32, #tpu.memory_space<vmem>>, vector<1x1x8x4xf32>
    %26 = vector.shape_cast %25 : vector<1x1x8x4xf32> to vector<8x4xf32>
    %c0_30 = arith.constant 0 : index
    %c0_31 = arith.constant 0 : index
    %c19 = arith.constant 19 : index
    %27 = vector.load %arg3[%c0_30, %c0_31, %c19] : memref<1x4x324xf32, #tpu.memory_space<vmem>>, vector<1x4x286xf32>
    %28 = vector.shape_cast %27 : vector<1x4x286xf32> to vector<4x286xf32>
    %cst_32 = arith.constant dense<0.000000e+00> : vector<8x286xf32>
    %29 = tpu.matmul %26, %28, %cst_32 {dimension_numbers = #tpu.dot_dimension_numbers<[1], [0], [0], [1], [0, 0, 1, 1], [], []>} : vector<8x4xf32>, vector<4x286xf32>, vector<8x286xf32> -> vector<8x286xf32>
    %30 = arith.addf %24, %29 : vector<8x286xf32>
    %c0_33 = arith.constant 0 : index
    %c5 = arith.constant 5 : index
    %c0_34 = arith.constant 0 : index
    %c0_35 = arith.constant 0 : index
    %31 = vector.load %arg4[%c0_33, %c5, %c0_34, %c0_35] : memref<1x9x8x4xf32, #tpu.memory_space<vmem>>, vector<1x1x8x4xf32>
    %32 = vector.shape_cast %31 : vector<1x1x8x4xf32> to vector<8x4xf32>
    %c0_36 = arith.constant 0 : index
    %c0_37 = arith.constant 0 : index
    %c20 = arith.constant 20 : index
    %33 = vector.load %arg3[%c0_36, %c0_37, %c20] : memref<1x4x324xf32, #tpu.memory_space<vmem>>, vector<1x4x286xf32>
    %34 = vector.shape_cast %33 : vector<1x4x286xf32> to vector<4x286xf32>
    %cst_38 = arith.constant dense<0.000000e+00> : vector<8x286xf32>
    %35 = tpu.matmul %32, %34, %cst_38 {dimension_numbers = #tpu.dot_dimension_numbers<[1], [0], [0], [1], [0, 0, 1, 1], [], []>} : vector<8x4xf32>, vector<4x286xf32>, vector<8x286xf32> -> vector<8x286xf32>
    %36 = arith.addf %30, %35 : vector<8x286xf32>
    %c0_39 = arith.constant 0 : index
    %c6 = arith.constant 6 : index
    %c0_40 = arith.constant 0 : index
    %c0_41 = arith.constant 0 : index
    %37 = vector.load %arg4[%c0_39, %c6, %c0_40, %c0_41] : memref<1x9x8x4xf32, #tpu.memory_space<vmem>>, vector<1x1x8x4xf32>
    %38 = vector.shape_cast %37 : vector<1x1x8x4xf32> to vector<8x4xf32>
    %c0_42 = arith.constant 0 : index
    %c0_43 = arith.constant 0 : index
    %c36 = arith.constant 36 : index
    %39 = vector.load %arg3[%c0_42, %c0_43, %c36] : memref<1x4x324xf32, #tpu.memory_space<vmem>>, vector<1x4x286xf32>
    %40 = vector.shape_cast %39 : vector<1x4x286xf32> to vector<4x286xf32>
    %cst_44 = arith.constant dense<0.000000e+00> : vector<8x286xf32>
    %41 = tpu.matmul %38, %40, %cst_44 {dimension_numbers = #tpu.dot_dimension_numbers<[1], [0], [0], [1], [0, 0, 1, 1], [], []>} : vector<8x4xf32>, vector<4x286xf32>, vector<8x286xf32> -> vector<8x286xf32>
    %42 = arith.addf %36, %41 : vector<8x286xf32>
    %c0_45 = arith.constant 0 : index
    %c7 = arith.constant 7 : index
    %c0_46 = arith.constant 0 : index
    %c0_47 = arith.constant 0 : index
    %43 = vector.load %arg4[%c0_45, %c7, %c0_46, %c0_47] : memref<1x9x8x4xf32, #tpu.memory_space<vmem>>, vector<1x1x8x4xf32>
    %44 = vector.shape_cast %43 : vector<1x1x8x4xf32> to vector<8x4xf32>
    %c0_48 = arith.constant 0 : index
    %c0_49 = arith.constant 0 : index
    %c37 = arith.constant 37 : index
    %45 = vector.load %arg3[%c0_48, %c0_49, %c37] : memref<1x4x324xf32, #tpu.memory_space<vmem>>, vector<1x4x286xf32>
    %46 = vector.shape_cast %45 : vector<1x4x286xf32> to vector<4x286xf32>
    %cst_50 = arith.constant dense<0.000000e+00> : vector<8x286xf32>
    %47 = tpu.matmul %44, %46, %cst_50 {dimension_numbers = #tpu.dot_dimension_numbers<[1], [0], [0], [1], [0, 0, 1, 1], [], []>} : vector<8x4xf32>, vector<4x286xf32>, vector<8x286xf32> -> vector<8x286xf32>
    %48 = arith.addf %42, %47 : vector<8x286xf32>
    %c0_51 = arith.constant 0 : index
    %c8 = arith.constant 8 : index
    %c0_52 = arith.constant 0 : index
    %c0_53 = arith.constant 0 : index
    %49 = vector.load %arg4[%c0_51, %c8, %c0_52, %c0_53] : memref<1x9x8x4xf32, #tpu.memory_space<vmem>>, vector<1x1x8x4xf32>
    %50 = vector.shape_cast %49 : vector<1x1x8x4xf32> to vector<8x4xf32>
    %c0_54 = arith.constant 0 : index
    %c0_55 = arith.constant 0 : index
    %c38 = arith.constant 38 : index
    %51 = vector.load %arg3[%c0_54, %c0_55, %c38] : memref<1x4x324xf32, #tpu.memory_space<vmem>>, vector<1x4x286xf32>
    %52 = vector.shape_cast %51 : vector<1x4x286xf32> to vector<4x286xf32>
    %cst_56 = arith.constant dense<0.000000e+00> : vector<8x286xf32>
    %53 = tpu.matmul %50, %52, %cst_56 {dimension_numbers = #tpu.dot_dimension_numbers<[1], [0], [0], [1], [0, 0, 1, 1], [], []>} : vector<8x4xf32>, vector<4x286xf32>, vector<8x286xf32> -> vector<8x286xf32>
    %54 = arith.addf %48, %53 : vector<8x286xf32>
    %c0_57 = arith.constant 0 : index
    %c0_58 = arith.constant 0 : index
    %55 = vector.load %arg5[%c0_57, %c0_58] : memref<8x1xf32, #tpu.memory_space<vmem>>, vector<8x1xf32>
    %56 = arith.index_cast %arg0 : i32 to index
    %57 = memref.load %arg1[%56] : memref<28xi32, #tpu.memory_space<smem>>
    %58 = arith.sitofp %57 : i32 to f32
    %59 = vector.broadcast %58 : f32 to vector<8x1xf32>
    %60 = arith.mulf %55, %59 : vector<8x1xf32>
    %61 = vector.broadcast %60 : vector<8x1xf32> to vector<8x286xf32>
    %62 = arith.addf %54, %61 : vector<8x286xf32>
    %c0_59 = arith.constant 0 : index
    %c0_60 = arith.constant 0 : index
    %c0_61 = arith.constant 0 : index
    %63 = vector.load %arg6[%c0_59, %c0_60, %c0_61] : memref<1x8x286xf32, #tpu.memory_space<vmem>>, vector<1x8x286xf32>
    %64 = vector.shape_cast %63 : vector<1x8x286xf32> to vector<8x286xf32>
    %65 = vector.shape_cast %62 : vector<8x286xf32> to vector<1x8x286xf32>
    tpu.vector_store %arg6[%c0_59, %c0_60, %c0_61], %65 {strides = array<i32>} : memref<1x8x286xf32, #tpu.memory_space<vmem>>, vector<1x8x286xf32>,
    return
  }
  func.func @transform_0(%arg0: i32, %arg1: memref<28xi32, #tpu.memory_space<smem>>, %arg2: memref<28xi32, #tpu.memory_space<smem>>) -> (i32, i32, i32) {
    %c0_i32 = arith.constant 0 : i32
    %c0_i32_0 = arith.constant 0 : i32
    %c0_i32_1 = arith.constant 0 : i32
    return %arg0, %c0_i32, %c0_i32_0 : i32, i32, i32
  }
  func.func @transform_1(%arg0: i32, %arg1: memref<28xi32, #tpu.memory_space<smem>>, %arg2: memref<28xi32, #tpu.memory_space<smem>>) -> (i32, i32, i32, i32) {
    %0 = arith.index_cast %arg0 : i32 to index
    %1 = memref.load %arg2[%0] : memref<28xi32, #tpu.memory_space<smem>>
    %c0_i32 = arith.constant 0 : i32
    %c0_i32_0 = arith.constant 0 : i32
    %c0_i32_1 = arith.constant 0 : i32
    %c0_i32_2 = arith.constant 0 : i32
    return %1, %c0_i32, %c0_i32_0, %c0_i32_1 : i32, i32, i32, i32
  }
  func.func @transform_2(%arg0: i32, %arg1: memref<28xi32, #tpu.memory_space<smem>>, %arg2: memref<28xi32, #tpu.memory_space<smem>>) -> (i32, i32) {
    %c0_i32 = arith.constant 0 : i32
    %c0_i32_0 = arith.constant 0 : i32
    %c0_i32_1 = arith.constant 0 : i32
    return %c0_i32, %c0_i32_0 : i32, i32
  }
  func.func @transform_3(%arg0: i32, %arg1: memref<28xi32, #tpu.memory_space<smem>>, %arg2: memref<28xi32, #tpu.memory_space<smem>>) -> (i32, i32, i32) {
    %c0_i32 = arith.constant 0 : i32
    %c0_i32_0 = arith.constant 0 : i32
    %c0_i32_1 = arith.constant 0 : i32
    return %arg0, %c0_i32, %c0_i32_0 : i32, i32, i32
  }
}

</mosaic_0001>

<llo_original>
// kernel: tpu_custom_call.1
$region0: #{tpu_custom_call.1}
  #allocation0 [shape = 'u32[]', space=smem, size = 0x4, offset = 0x4, fixed_abs, tag = 'smem constant byte address 0x4 - core index']
  #allocation1 [shape = 'u32[144,128]{1,0:T(1,128)}', space=vmem, size = 0x12000, scoped, tag = 'internal scratch']
  #allocation2 [shape = 's32[1]{0}', space=sflag, size = 0x4, scoped, tag = 'scoped memory for tpu_custom_call.1']
  #allocation3 [shape = 'u8[512]{0}', space=smem, size = 0x200, scoped, tag = 'prefetched SMEM operand 0']
  #allocation4 [shape = 'u8[512]{0}', space=smem, size = 0x200, scoped, tag = 'prefetched SMEM operand 1']
  %s0 = inlined_call_operand.vmem [shape: s32[28], index: 0, kind: input, shape index: {}]
  %s1 = inlined_call_operand.vmem [shape: s32[28], index: 1, kind: input, shape index: {}]
  %s2 = inlined_call_operand.hbm [shape: f32[28,4,324], index: 2, kind: input, shape index: {}]
  %s3 = inlined_call_operand.vmem [shape: f32[2,9,8,4], index: 3, kind: input, shape index: {}]
  %s4 = inlined_call_operand.vmem [shape: f32[8,1], index: 4, kind: input, shape index: {}]
  %s5 = inlined_call_operand.hbm [shape: f32[28,8,286], index: 5, kind: output, shape index: {}]
  %s6 = sld [smem:[#allocation0]]
  $region49: #{tpu_custom_call.1} parent=0
    _
  %s8 = ssub.s32 1, %s6
  %s9 = scalar_select 0, %s8, %s6
  %s10 = sshll.u32 %s0, 4
  %s11 = int_to_ptr.vmem [resolvable:$true] %s10
  %13 = dma.vmem_to_smem %s11, 16, [#allocation3], [#allocation2]
  %s14 = sshll.u32 %s1, 4
  %s15 = int_to_ptr.vmem [resolvable:$true] %s14
  %17 = dma.vmem_to_smem %s15, 16, [#allocation4], [#allocation2]
  %18 = dma.done [#allocation2], 32
  %19 = sfence
  $region1: #{tpu_custom_call.1} parent=0
    #allocation5 [shape = 'u8[12288]{0}', space=vmem, size = 0x3000, scoped, tag = 'input window, operand 2']
    #allocation6 [shape = 's32[2]{0}', space=sflag, size = 0x8, scoped, tag = 'scoped memory for tpu_custom_call.1']
    #allocation7 [shape = 's32[2]{0}', space=sflag, size = 0x8, scoped, tag = 'scoped memory for tpu_custom_call.1']
    #allocation8 [shape = 'u8[24576]{0}', space=vmem, size = 0x6000, scoped, tag = 'output window, operand 0']
    %20 = vsyncpa [#allocation6], 0
    %s21 = scalar_lea.sflag [#allocation6], 1
    %22 = vsyncpa %s21, 0
    %23 = vsyncpa [#allocation7], 0
    %s24 = scalar_lea.sflag [#allocation7], 1
    %25 = vsyncpa %s24, 0
    loop: start=0, step=1, limit=30
    $region2: #{tpu_custom_call.1} parent=1 // loop_pre_header
      _
    $region3: #{tpu_custom_call.1} parent=1 // loop_header
      %s27 = sphi 0, %s31
      %p28 = scmp.ge.s32.totalorder %s27, 30
      %s37 = sphi 0, %s39
      %s40 = sphi 0, %s37
      %s41 = sphi 0, %s40
      %s57 = sphi 0, %s41
      %s65 = sphi 0, %s67
      %s68 = sphi 0, %s65
      %s69 = sphi 0, %s68
      %s85 = sphi 0, %s69
      %s89 = sphi 0, %s89
      %s91 = sphi 0, %s89
      %s92 = sphi 0, %s91
      %s106 = sphi 0, %s92
      %s112 = sphi 0, %s114
      %s115 = sphi 0, %s112
      %s116 = sphi 0, %s115
      %s132 = sphi 0, %s116
    $region4: #{tpu_custom_call.1} parent=1 // loop_header_branch
      %30 = sbr.rel (%p28) target = $region8
    $region5: #{tpu_custom_call.1} parent=1 // loop_body
      %s32 = ssub.s32 %s27, 1
      %s33 = ssub.s32 %s27, 2
      %s34 = sadd.s32 %s27, 1
      %s35 = ssub.s32 %s27, %s34
      %p36 = scmp.eq.s32.totalorder %s35, 0
      %s38 = sadd.s32 %s37, 1
      %s39 = scalar_select %p36, %s37, %s38
      %p42 = pneg %p36
      %p43 = scmp.eq.s32.totalorder %s27, 27
      %p44 = por %p42, %p43
      %p45 = scmp.ne.s32.totalorder %s37, %s40
      %p46 = scmp.eq.s32.totalorder %s27, 0
      %p47 = por %p45, %p46
      %p48 = scmp.ne.s32.totalorder %s37, %s40
      %p49 = scmp.eq.s32.totalorder %s32, 27
      %p50 = por %p48, %p49
      %p51 = scmp.ne.s32.totalorder %s40, %s41
      %p52 = scmp.eq.s32.totalorder %s32, 0
      %p53 = por %p51, %p52
      %p54 = scmp.ne.s32.totalorder %s40, %s41
      %p55 = scmp.eq.s32.totalorder %s33, 27
      %p56 = por %p54, %p55
      %p58 = scmp.ne.s32.totalorder %s41, %s57
      %p59 = scmp.eq.s32.totalorder %s33, 0
      %p60 = por %p58, %p59
      %s61 = sld [smem:[#allocation4 + %s27]]
      %s62 = sld [smem:[#allocation4 + %s34]]
      %s63 = ssub.s32 %s61, %s62
      %p64 = scmp.eq.s32.totalorder %s63, 0
      %s66 = sadd.s32 %s65, 1
      %s67 = scalar_select %p64, %s65, %s66
      %p70 = pneg %p64
      %p71 = scmp.eq.s32.totalorder %s27, 27
      %p72 = por %p70, %p71
      %p73 = scmp.ne.s32.totalorder %s65, %s68
      %p74 = scmp.eq.s32.totalorder %s27, 0
      %p75 = por %p73, %p74
      %p76 = scmp.ne.s32.totalorder %s65, %s68
      %p77 = scmp.eq.s32.totalorder %s32, 27
      %p78 = por %p76, %p77
      %p79 = scmp.ne.s32.totalorder %s68, %s69
      %p80 = scmp.eq.s32.totalorder %s32, 0
      %p81 = por %p79, %p80
      %p82 = scmp.ne.s32.totalorder %s68, %s69
      %p83 = scmp.eq.s32.totalorder %s33, 27
      %p84 = por %p82, %p83
      %p86 = scmp.ne.s32.totalorder %s69, %s85
      %p87 = scmp.eq.s32.totalorder %s33, 0
      %p88 = por %p86, %p87
      %s90 = sadd.s32 %s89, 1
      %p93 = scmp.eq.s32.totalorder %s27, 27
      %p94 = scmp.ne.s32.totalorder %s89, %s91
      %p95 = scmp.eq.s32.totalorder %s27, 0
      %p96 = por %p94, %p95
      %p97 = scmp.ne.s32.totalorder %s89, %s91
      %p98 = scmp.eq.s32.totalorder %s32, 27
      %p99 = por %p97, %p98
      %p100 = scmp.ne.s32.totalorder %s91, %s92
      %p101 = scmp.eq.s32.totalorder %s32, 0
      %p102 = por %p100, %p101
      %p103 = scmp.ne.s32.totalorder %s91, %s92
      %p104 = scmp.eq.s32.totalorder %s33, 27
      %p105 = por %p103, %p104
      %p107 = scmp.ne.s32.totalorder %s92, %s106
      %p108 = scmp.eq.s32.totalorder %s33, 0
      %p109 = por %p107, %p108
      %s110 = ssub.s32 %s27, %s34
      %p111 = scmp.eq.s32.totalorder %s110, 0
      %s113 = sadd.s32 %s112, 1
      %s114 = scalar_select %p111, %s112, %s113
      %p117 = pneg %p111
      %p118 = scmp.eq.s32.totalorder %s27, 27
      %p119 = por %p117, %p118
      %p120 = scmp.ne.s32.totalorder %s112, %s115
      %p121 = scmp.eq.s32.totalorder %s27, 0
      %p122 = por %p120, %p121
      %p123 = scmp.ne.s32.totalorder %s112, %s115
      %p124 = scmp.eq.s32.totalorder %s32, 27
      %p125 = por %p123, %p124
      %p126 = scmp.ne.s32.totalorder %s115, %s116
      %p127 = scmp.eq.s32.totalorder %s32, 0
      %p128 = por %p126, %p127
      %p129 = scmp.ne.s32.totalorder %s115, %s116
      %p130 = scmp.eq.s32.totalorder %s33, 27
      %p131 = por %p129, %p130
      %p133 = scmp.ne.s32.totalorder %s116, %s132
      %p134 = scmp.eq.s32.totalorder %s33, 0
      %p135 = por %p133, %p134
      %p136 = scmp.le.s32.totalorder 1, %s27
      %p137 = scmp.lt.s32.totalorder %s27, 29
      %p138 = pnand %p136, %p137
      %p139 = pneg %p138
      // Predicated region
      $region9: #{tpu_custom_call.1} parent=5 // pred_check
        _
      $region10: #{tpu_custom_call.1} parent=5 // pred_check_branch
        %141 = sbr.rel (%p138) target = $region12
      $region11: #{tpu_custom_call.1} parent=5 // pred_region
        %s142 = ssub.s32 %s27, 1
        // Predicated region
        $region13: #{tpu_custom_call.1} parent=11 // pred_check
          %p143 = pneg %p102
        $region14: #{tpu_custom_call.1} parent=11 // pred_check_branch
          %145 = sbr.rel (%p143) target = $region16
        $region15: #{tpu_custom_call.1} parent=11 // pred_region
          _
        $region16: #{tpu_custom_call.1} parent=11 // pred_fallthru
          _
      $region12: #{tpu_custom_call.1} parent=5 // pred_fallthru
        _
      %p146 = scmp.lt.s32.totalorder %s27, 28
      // Predicated region
      $region17: #{tpu_custom_call.1} parent=5 // pred_check
        %p147 = pneg %p146
      $region18: #{tpu_custom_call.1} parent=5 // pred_check_branch
        %149 = sbr.rel (%p147) target = $region20
      $region19: #{tpu_custom_call.1} parent=5 // pred_region
        // Predicated region
        $region21: #{tpu_custom_call.1} parent=19 // pred_check
          %p150 = pneg %p47
        $region22: #{tpu_custom_call.1} parent=19 // pred_check_branch
          %152 = sbr.rel (%p150) target = $region24
        $region23: #{tpu_custom_call.1} parent=19 // pred_region
          %s153 = sand.u32 %s37, 1
          %s154 = scalar_lea.sflag [#allocation6], %s153
          %s155 = sand.u32 %s37, 1
          %s156 = smul.addr %s155, 12
          %s157 = scalar_lea.vmem [#allocation5], %s156
          %s159 = ssub.s32 192, 192
          %160 = vsyncadd %s154, %s159
          %s161 = smul.addr %s27, 3
          %s162 = smul.addr %s161, 64
          %s163 = scalar_lea.hbm %s2, %s162
          %s165 = sshll.u32 %s157, 4
          %s166 = int_to_ptr.vmem [resolvable:$true] %s165
          %168 = dma.hbm_to_vmem [thread:$0]  %s163, 192, %s166, %s154
        $region24: #{tpu_custom_call.1} parent=19 // pred_fallthru
          _
        // Predicated region
        $region25: #{tpu_custom_call.1} parent=19 // pred_check
          %p169 = pneg %p75
        $region26: #{tpu_custom_call.1} parent=19 // pred_check_branch
          %171 = sbr.rel (%p169) target = $region28
        $region27: #{tpu_custom_call.1} parent=19 // pred_region
          %s172 = sld [smem:[#allocation4 + %s27]]
          %p173 = scmp.lt.s32.totalorder %s172, 1
          %s174 = scalar_select %p173, %s172, 1
          %s175 = smul.addr %s174, 9
          %s176 = smul.addr %s175, 8
          %s177 = scalar_lea.vmem %s3, %s176
          %s178 = sld [smem:[#allocation4 + %s27]]
        $region28: #{tpu_custom_call.1} parent=19 // pred_fallthru
          _
      $region20: #{tpu_custom_call.1} parent=5 // pred_fallthru
        _
      %p179 = scmp.le.s32.totalorder 1, %s27
      %p180 = scmp.lt.s32.totalorder %s27, 29
      %p181 = pnand %p179, %p180
      %p182 = pneg %p181
      // Predicated region
      $region29: #{tpu_custom_call.1} parent=5 // pred_check
        _
      $region30: #{tpu_custom_call.1} parent=5 // pred_check_branch
        %184 = sbr.rel (%p181) target = $region32
      $region31: #{tpu_custom_call.1} parent=5 // pred_region
        %s185 = ssub.s32 %s27, 1
        %s186 = sand.u32 %s40, 1
        %s187 = scalar_lea.sflag [#allocation6], %s186
        %s188 = sand.u32 %s40, 1
        %s189 = smul.addr %s188, 12
        %s190 = scalar_lea.vmem [#allocation5], %s189
        // Predicated region
        $region33: #{tpu_custom_call.1} parent=31 // pred_check
          %p191 = pneg %p53
        $region34: #{tpu_custom_call.1} parent=31 // pred_check_branch
          %193 = sbr.rel (%p191) target = $region36
        $region35: #{tpu_custom_call.1} parent=31 // pred_region
          %194 = dma.done %s187, 192
        $region36: #{tpu_custom_call.1} parent=31 // pred_fallthru
          _
        %s195 = sand.u32 %s40, 1
        %s196 = scalar_lea.sflag [#allocation6], %s195
        %s197 = sand.u32 %s40, 1
        %s198 = smul.addr %s197, 12
        %s199 = scalar_lea.vmem [#allocation5], %s198
        %p200 = pneg %p53
        %p201 = pneg %p50
        %s202 = sld [smem:[#allocation4 + %s32]]
        %p203 = scmp.lt.s32.totalorder %s202, 1
        %s204 = scalar_select %p203, %s202, 1
        %s205 = smul.addr %s204, 9
        %s206 = smul.addr %s205, 8
        %s207 = scalar_lea.vmem %s3, %s206
        %p208 = pneg %p81
        %p209 = pneg %p78
        %p210 = pneg %p102
        %p211 = pneg %p99
        %p212 = pneg %p128
        %p213 = pneg %p125
        %s214 = sand.u32 %s115, 1
        %s215 = scalar_lea.sflag [#allocation7], %s214
        %s216 = sand.u32 %s115, 1
        %s217 = smul.addr %s216, 24
        %s218 = scalar_lea.vmem [#allocation8], %s217
        %s219 = sld [smem:[#allocation4 + %s32]]
        %p220 = scmp.lt.s32.totalorder %s219, 1
        %s221 = scalar_select %p220, %s219, 1
        %s222 = smul.addr %s221, 9
        %s223 = smul.addr %s222, 8
        %s224 = scalar_lea.vmem %s3, %s223
        %s225 = sld [smem:[#allocation4 + %s32]]
        %v226 = vld [vmem:[%s224] sm:$0xff]
        %v227 = vld [vmem:[%s190] sm:$0xff]
        %v228 = vld [vmem:[%s190 + $0x8] sm:$0xf]
        %s229 = scalar_lea.vmem %s224, 8
        %v230 = vld [vmem:[%s229] sm:$0xff]
        %v233 = vcombine.high %v227, %v227
        %234 = vrot.lane.b32.xlu0 %v227, 127
        %v235 = vpop.permute.xlu0 %234
        %236 = vrot.lane.b32.xlu0 %v233, 127
        %v237 = vpop.permute.xlu0 %236
        %238 = vrot.lane.b32.xlu0 %v228, 127
        %v239 = vpop.permute.xlu0 %238
        %vm240 = vcmask 1039360
        %v241 = vsel %vm240, %v235, %v237
        %v242 = vsel %vm240, %v237, %v239
        %vm243 = vcmask 31744
        %v245 = vsel %vm243, %v230, 0
        %vm247 = vcmask 1043456
        %v248 = vsel %vm247, %v241, 0
        %v250 = vsel %vm247, %v242, 0
        %v252 = vsel %vm247, %v239, 0
        %254 = vmatprep.subr.mxu0 0.0
        %255 = vmatpush1.msra.mxu0 0.0
        %256 = vmatprep.subr.mxu0 0.0
        %257 = vmatpush1.msra.mxu0 0.0
        %258 = vmatprep.subr.mxu0 0.0
        %259 = vmatpush1.msra.mxu0 0.0
        %260 = vmatprep.subr.mxu0 0.0
        %261 = vmatpush1.msra.mxu0 0.0
        %262 = vmatprep.subr.mxu0 0.0
        %263 = vmatpush1.msra.mxu0 0.0
        %264 = vmatprep.subr.mxu0 0.0
        %265 = vmatpush1.msra.mxu0 0.0
        %266 = vmatprep.subr.mxu0 0.0
        %267 = vmatpush1.msra.mxu0 0.0
        %268 = vmatprep.subr.mxu0 0.0
        %269 = vmatpush1.msra.mxu0 0.0
        %270 = vmatprep.subr.mxu0 0.0
        %271 = vmatpush1.msra.mxu0 0.0
        %272 = vmatprep.subr.mxu0 0.0
        %273 = vmatpush1.msra.mxu0 0.0
        %274 = vmatprep.subr.mxu0 0.0
        %275 = vmatpush1.msra.mxu0 0.0
        %276 = vmatprep.subr.mxu0 0.0
        %277 = vmatpush1.msra.mxu0 0.0
        %278 = vmatprep.subr.mxu0 0.0
        %279 = vmatpush1.msra.mxu0 0.0
        %280 = vmatprep.subr.mxu0 0.0
        %281 = vmatpush1.msra.mxu0 0.0
        %282 = vmatprep.subr.mxu0 0.0
        %283 = vmatpush1.msra.mxu0 0.0
        %284 = vmatprep.subr.mxu0 %v250
        %285 = vmatpush1.msra.mxu0 %v248
        %286 = vmatprep.subr.mxu0 0.0
        %287 = vmatpush2.msra.mxu0 0.0
        %288 = vmatprep.subr.mxu0 0.0
        %289 = vmatpush2.msra.mxu0 0.0
        %290 = vmatprep.subr.mxu0 0.0
        %291 = vmatpush2.msra.mxu0 0.0
        %292 = vmatprep.subr.mxu0 0.0
        %293 = vmatpush2.msra.mxu0 0.0
        %294 = vmatprep.subr.mxu0 0.0
        %295 = vmatpush2.msra.mxu0 0.0
        %296 = vmatprep.subr.mxu0 0.0
        %297 = vmatpush2.msra.mxu0 0.0
        %298 = vmatprep.subr.mxu0 0.0
        %299 = vmatpush2.msra.mxu0 0.0
        %300 = vmatprep.subr.mxu0 0.0
        %301 = vmatpush2.msra.mxu0 0.0
        %302 = vmatprep.subr.mxu0 0.0
        %303 = vmatpush2.msra.mxu0 0.0
        %304 = vmatprep.subr.mxu0 0.0
        %305 = vmatpush2.msra.mxu0 0.0
        %306 = vmatprep.subr.mxu0 0.0
        %307 = vmatpush2.msra.mxu0 0.0
        %308 = vmatprep.subr.mxu0 0.0
        %309 = vmatpush2.msra.mxu0 0.0
        %310 = vmatprep.subr.mxu0 0.0
        %311 = vmatpush2.msra.mxu0 0.0
        %312 = vmatprep.subr.mxu0 0.0
        %313 = vmatpush2.msra.mxu0 0.0
        %314 = vmatprep.subr.mxu0 0.0
        %315 = vmatpush2.msra.mxu0 0.0
        %316 = vmatprep.subr.mxu0 0.0
        %317 = vmatpush2.msra.mxu0 0.0
        %318 = vmatprep.mubr.f32.mxu0 0.0
        %319 = vmatmul.mubr.f32.gmra.mxu0 %v245
        %v320 = vpop.f32.mrf.mxu0
        %v321 = vadd.f32 0.0, %v320
        %v322 = vpop.f32.mrf.mxu0
        %v323 = vadd.f32 0.0, %v322
        %324 = vdwg.mxu0
        %325 = vmatprep.subr.mxu0 0.0
        %326 = vmatpush1.msra.mxu0 0.0
        %327 = vmatprep.subr.mxu0 0.0
        %328 = vmatpush1.msra.mxu0 0.0
        %329 = vmatprep.subr.mxu0 0.0
        %330 = vmatpush1.msra.mxu0 0.0
        %331 = vmatprep.subr.mxu0 0.0
        %332 = vmatpush1.msra.mxu0 0.0
        %333 = vmatprep.subr.mxu0 0.0
        %334 = vmatpush1.msra.mxu0 0.0
        %335 = vmatprep.subr.mxu0 0.0
        %336 = vmatpush1.msra.mxu0 0.0
        %337 = vmatprep.subr.mxu0 0.0
        %338 = vmatpush1.msra.mxu0 0.0
        %339 = vmatprep.subr.mxu0 0.0
        %340 = vmatpush1.msra.mxu0 0.0
        %341 = vmatprep.subr.mxu0 0.0
        %342 = vmatpush1.msra.mxu0 0.0
        %343 = vmatprep.subr.mxu0 0.0
        %344 = vmatpush1.msra.mxu0 0.0
        %345 = vmatprep.subr.mxu0 0.0
        %346 = vmatpush1.msra.mxu0 0.0
        %347 = vmatprep.subr.mxu0 0.0
        %348 = vmatpush1.msra.mxu0 0.0
        %349 = vmatprep.subr.mxu0 0.0
        %350 = vmatpush1.msra.mxu0 0.0
        %351 = vmatprep.subr.mxu0 0.0
        %352 = vmatpush1.msra.mxu0 0.0
        %353 = vmatprep.subr.mxu0 0.0
        %354 = vmatpush1.msra.mxu0 0.0
        %355 = vmatprep.subr.mxu0 0.0
        %356 = vmatpush1.msra.mxu0 %v252
        %357 = vmatprep.subr.mxu0 0.0
        %358 = vmatpush2.msra.mxu0 0.0
        %359 = vmatprep.subr.mxu0 0.0
        %360 = vmatpush2.msra.mxu0 0.0
        %361 = vmatprep.subr.mxu0 0.0
        %362 = vmatpush2.msra.mxu0 0.0
        %363 = vmatprep.subr.mxu0 0.0
        %364 = vmatpush2.msra.mxu0 0.0
        %365 = vmatprep.subr.mxu0 0.0
        %366 = vmatpush2.msra.mxu0 0.0
        %367 = vmatprep.subr.mxu0 0.0
        %368 = vmatpush2.msra.mxu0 0.0
        %369 = vmatprep.subr.mxu0 0.0
        %370 = vmatpush2.msra.mxu0 0.0
        %371 = vmatprep.subr.mxu0 0.0
        %372 = vmatpush2.msra.mxu0 0.0
        %373 = vmatprep.subr.mxu0 0.0
        %374 = vmatpush2.msra.mxu0 0.0
        %375 = vmatprep.subr.mxu0 0.0
        %376 = vmatpush2.msra.mxu0 0.0
        %377 = vmatprep.subr.mxu0 0.0
        %378 = vmatpush2.msra.mxu0 0.0
        %379 = vmatprep.subr.mxu0 0.0
        %380 = vmatpush2.msra.mxu0 0.0
        %381 = vmatprep.subr.mxu0 0.0
        %382 = vmatpush2.msra.mxu0 0.0
        %383 = vmatprep.subr.mxu0 0.0
        %384 = vmatpush2.msra.mxu0 0.0
        %385 = vmatprep.subr.mxu0 0.0
        %386 = vmatpush2.msra.mxu0 0.0
        %387 = vmatprep.subr.mxu0 0.0
        %388 = vmatpush2.msra.mxu0 0.0
        %389 = vmatprep.mubr.f32.mxu0 0.0
        %390 = vmatmul.mubr.f32.gmra.mxu0 %v245
        %v391 = vpop.f32.mrf.mxu0
        %v392 = vadd.f32 0.0, %v391
        %v393 = vpop.f32.mrf.mxu0
        %394 = vdwg.mxu0
        %v396 = vsel %vm243, %v226, 0
        %v398 = vsel %vm247, %v227, 0
        %v400 = vsel %vm247, %v233, 0
        %v402 = vsel %vm247, %v228, 0
        %404 = vmatprep.subr.mxu0 0.0
        %405 = vmatpush1.msra.mxu0 0.0
        %406 = vmatprep.subr.mxu0 0.0
        %407 = vmatpush1.msra.mxu0 0.0
        %408 = vmatprep.subr.mxu0 0.0
        %409 = vmatpush1.msra.mxu0 0.0
        %410 = vmatprep.subr.mxu0 0.0
        %411 = vmatpush1.msra.mxu0 0.0
        %412 = vmatprep.subr.mxu0 0.0
        %413 = vmatpush1.msra.mxu0 0.0
        %414 = vmatprep.subr.mxu0 0.0
        %415 = vmatpush1.msra.mxu0 0.0
        %416 = vmatprep.subr.mxu0 0.0
        %417 = vmatpush1.msra.mxu0 0.0
        %418 = vmatprep.subr.mxu0 0.0
        %419 = vmatpush1.msra.mxu0 0.0
        %420 = vmatprep.subr.mxu0 0.0
        %421 = vmatpush1.msra.mxu0 0.0
        %422 = vmatprep.subr.mxu0 0.0
        %423 = vmatpush1.msra.mxu0 0.0
        %424 = vmatprep.subr.mxu0 0.0
        %425 = vmatpush1.msra.mxu0 0.0
        %426 = vmatprep.subr.mxu0 0.0
        %427 = vmatpush1.msra.mxu0 0.0
        %428 = vmatprep.subr.mxu0 0.0
        %429 = vmatpush1.msra.mxu0 0.0
        %430 = vmatprep.subr.mxu0 0.0
        %431 = vmatpush1.msra.mxu0 0.0
        %432 = vmatprep.subr.mxu0 0.0
        %433 = vmatpush1.msra.mxu0 0.0
        %434 = vmatprep.subr.mxu0 %v400
        %435 = vmatpush1.msra.mxu0 %v398
        %436 = vmatprep.subr.mxu0 0.0
        %437 = vmatpush2.msra.mxu0 0.0
        %438 = vmatprep.subr.mxu0 0.0
        %439 = vmatpush2.msra.mxu0 0.0
        %440 = vmatprep.subr.mxu0 0.0
        %441 = vmatpush2.msra.mxu0 0.0
        %442 = vmatprep.subr.mxu0 0.0
        %443 = vmatpush2.msra.mxu0 0.0
        %444 = vmatprep.subr.mxu0 0.0
        %445 = vmatpush2.msra.mxu0 0.0
        %446 = vmatprep.subr.mxu0 0.0
        %447 = vmatpush2.msra.mxu0 0.0
        %448 = vmatprep.subr.mxu0 0.0
        %449 = vmatpush2.msra.mxu0 0.0
        %450 = vmatprep.subr.mxu0 0.0
        %451 = vmatpush2.msra.mxu0 0.0
        %452 = vmatprep.subr.mxu0 0.0
        %453 = vmatpush2.msra.mxu0 0.0
        %454 = vmatprep.subr.mxu0 0.0
        %455 = vmatpush2.msra.mxu0 0.0
        %456 = vmatprep.subr.mxu0 0.0
        %457 = vmatpush2.msra.mxu0 0.0
        %458 = vmatprep.subr.mxu0 0.0
        %459 = vmatpush2.msra.mxu0 0.0
        %460 = vmatprep.subr.mxu0 0.0
        %461 = vmatpush2.msra.mxu0 0.0
        %462 = vmatprep.subr.mxu0 0.0
        %463 = vmatpush2.msra.mxu0 0.0
        %464 = vmatprep.subr.mxu0 0.0
        %465 = vmatpush2.msra.mxu0 0.0
        %466 = vmatprep.subr.mxu0 0.0
        %467 = vmatpush2.msra.mxu0 0.0
        %468 = vmatprep.mubr.f32.mxu0 0.0
        %469 = vmatmul.mubr.f32.gmra.mxu0 %v396
        %v470 = vpop.f32.mrf.mxu0
        %v471 = vadd.f32 %v321, %v470
        %v472 = vpop.f32.mrf.mxu0
        %v473 = vadd.f32 %v323, %v472
        %474 = vdwg.mxu0
        %475 = vmatprep.subr.mxu0 0.0
        %476 = vmatpush1.msra.mxu0 0.0
        %477 = vmatprep.subr.mxu0 0.0
        %478 = vmatpush1.msra.mxu0 0.0
        %479 = vmatprep.subr.mxu0 0.0
        %480 = vmatpush1.msra.mxu0 0.0
        %481 = vmatprep.subr.mxu0 0.0
        %482 = vmatpush1.msra.mxu0 0.0
        %483 = vmatprep.subr.mxu0 0.0
        %484 = vmatpush1.msra.mxu0 0.0
        %485 = vmatprep.subr.mxu0 0.0
        %486 = vmatpush1.msra.mxu0 0.0
        %487 = vmatprep.subr.mxu0 0.0
        %488 = vmatpush1.msra.mxu0 0.0
        %489 = vmatprep.subr.mxu0 0.0
        %490 = vmatpush1.msra.mxu0 0.0
        %491 = vmatprep.subr.mxu0 0.0
        %492 = vmatpush1.msra.mxu0 0.0
        %493 = vmatprep.subr.mxu0 0.0
        %494 = vmatpush1.msra.mxu0 0.0
        %495 = vmatprep.subr.mxu0 0.0
        %496 = vmatpush1.msra.mxu0 0.0
        %497 = vmatprep.subr.mxu0 0.0
        %498 = vmatpush1.msra.mxu0 0.0
        %499 = vmatprep.subr.mxu0 0.0
        %500 = vmatpush1.msra.mxu0 0.0
        %501 = vmatprep.subr.mxu0 0.0
        %502 = vmatpush1.msra.mxu0 0.0
        %503 = vmatprep.subr.mxu0 0.0
        %504 = vmatpush1.msra.mxu0 0.0
        %505 = vmatprep.subr.mxu0 0.0
        %506 = vmatpush1.msra.mxu0 %v402
        %507 = vmatprep.subr.mxu0 0.0
        %508 = vmatpush2.msra.mxu0 0.0
        %509 = vmatprep.subr.mxu0 0.0
        %510 = vmatpush2.msra.mxu0 0.0
        %511 = vmatprep.subr.mxu0 0.0
        %512 = vmatpush2.msra.mxu0 0.0
        %513 = vmatprep.subr.mxu0 0.0
        %514 = vmatpush2.msra.mxu0 0.0
        %515 = vmatprep.subr.mxu0 0.0
        %516 = vmatpush2.msra.mxu0 0.0
        %517 = vmatprep.subr.mxu0 0.0
        %518 = vmatpush2.msra.mxu0 0.0
        %519 = vmatprep.subr.mxu0 0.0
        %520 = vmatpush2.msra.mxu0 0.0
        %521 = vmatprep.subr.mxu0 0.0
        %522 = vmatpush2.msra.mxu0 0.0
        %523 = vmatprep.subr.mxu0 0.0
        %524 = vmatpush2.msra.mxu0 0.0
        %525 = vmatprep.subr.mxu0 0.0
        %526 = vmatpush2.msra.mxu0 0.0
        %527 = vmatprep.subr.mxu0 0.0
        %528 = vmatpush2.msra.mxu0 0.0
        %529 = vmatprep.subr.mxu0 0.0
        %530 = vmatpush2.msra.mxu0 0.0
        %531 = vmatprep.subr.mxu0 0.0
        %532 = vmatpush2.msra.mxu0 0.0
        %533 = vmatprep.subr.mxu0 0.0
        %534 = vmatpush2.msra.mxu0 0.0
        %535 = vmatprep.subr.mxu0 0.0
        %536 = vmatpush2.msra.mxu0 0.0
        %537 = vmatprep.subr.mxu0 0.0
        %538 = vmatpush2.msra.mxu0 0.0
        %539 = vmatprep.mubr.f32.mxu0 0.0
        %540 = vmatmul.mubr.f32.gmra.mxu0 %v396
        %v541 = vpop.f32.mrf.mxu0
        %v542 = vadd.f32 %v392, %v541
        %v543 = vpop.f32.mrf.mxu0
        %544 = vdwg.mxu0
        %s545 = scalar_lea.vmem %s224, 16
        %v546 = vld [vmem:[%s545] sm:$0xff]
        %v547 = vld [vmem:[%s190] sm:$0xff]
        %v548 = vld [vmem:[%s190 + $0x8] sm:$0xf]
        %v551 = vcombine.high %v547, %v547
        %552 = vrot.lane.b32.xlu0 %v547, 126
        %v553 = vpop.permute.xlu0 %552
        %554 = vrot.lane.b32.xlu0 %v551, 126
        %v555 = vpop.permute.xlu0 %554
        %556 = vrot.lane.b32.xlu0 %v548, 126
        %v557 = vpop.permute.xlu0 %556
        %vm558 = vcmask 1031168
        %v559 = vsel %vm558, %v553, %v555
        %v560 = vsel %vm558, %v555, %v557
        %v562 = vsel %vm243, %v546, 0
        %v564 = vsel %vm247, %v559, 0
        %v566 = vsel %vm247, %v560, 0
        %v568 = vsel %vm247, %v557, 0
        %570 = vmatprep.subr.mxu0 0.0
        %571 = vmatpush1.msra.mxu0 0.0
        %572 = vmatprep.subr.mxu0 0.0
        %573 = vmatpush1.msra.mxu0 0.0
        %574 = vmatprep.subr.mxu0 0.0
        %575 = vmatpush1.msra.mxu0 0.0
        %576 = vmatprep.subr.mxu0 0.0
        %577 = vmatpush1.msra.mxu0 0.0
        %578 = vmatprep.subr.mxu0 0.0
        %579 = vmatpush1.msra.mxu0 0.0
        %580 = vmatprep.subr.mxu0 0.0
        %581 = vmatpush1.msra.mxu0 0.0
        %582 = vmatprep.subr.mxu0 0.0
        %583 = vmatpush1.msra.mxu0 0.0
        %584 = vmatprep.subr.mxu0 0.0
        %585 = vmatpush1.msra.mxu0 0.0
        %586 = vmatprep.subr.mxu0 0.0
        %587 = vmatpush1.msra.mxu0 0.0
        %588 = vmatprep.subr.mxu0 0.0
        %589 = vmatpush1.msra.mxu0 0.0
        %590 = vmatprep.subr.mxu0 0.0
        %591 = vmatpush1.msra.mxu0 0.0
        %592 = vmatprep.subr.mxu0 0.0
        %593 = vmatpush1.msra.mxu0 0.0
        %594 = vmatprep.subr.mxu0 0.0
        %595 = vmatpush1.msra.mxu0 0.0
        %596 = vmatprep.subr.mxu0 0.0
        %597 = vmatpush1.msra.mxu0 0.0
        %598 = vmatprep.subr.mxu0 0.0
        %599 = vmatpush1.msra.mxu0 0.0
        %600 = vmatprep.subr.mxu0 %v566
        %601 = vmatpush1.msra.mxu0 %v564
        %602 = vmatprep.subr.mxu0 0.0
        %603 = vmatpush2.msra.mxu0 0.0
        %604 = vmatprep.subr.mxu0 0.0
        %605 = vmatpush2.msra.mxu0 0.0
        %606 = vmatprep.subr.mxu0 0.0
        %607 = vmatpush2.msra.mxu0 0.0
        %608 = vmatprep.subr.mxu0 0.0
        %609 = vmatpush2.msra.mxu0 0.0
        %610 = vmatprep.subr.mxu0 0.0
        %611 = vmatpush2.msra.mxu0 0.0
        %612 = vmatprep.subr.mxu0 0.0
        %613 = vmatpush2.msra.mxu0 0.0
        %614 = vmatprep.subr.mxu0 0.0
        %615 = vmatpush2.msra.mxu0 0.0
        %616 = vmatprep.subr.mxu0 0.0
        %617 = vmatpush2.msra.mxu0 0.0
        %618 = vmatprep.subr.mxu0 0.0
        %619 = vmatpush2.msra.mxu0 0.0
        %620 = vmatprep.subr.mxu0 0.0
        %621 = vmatpush2.msra.mxu0 0.0
        %622 = vmatprep.subr.mxu0 0.0
        %623 = vmatpush2.msra.mxu0 0.0
        %624 = vmatprep.subr.mxu0 0.0
        %625 = vmatpush2.msra.mxu0 0.0
        %626 = vmatprep.subr.mxu0 0.0
        %627 = vmatpush2.msra.mxu0 0.0
        %628 = vmatprep.subr.mxu0 0.0
        %629 = vmatpush2.msra.mxu0 0.0
        %630 = vmatprep.subr.mxu0 0.0
        %631 = vmatpush2.msra.mxu0 0.0
        %632 = vmatprep.subr.mxu0 0.0
        %633 = vmatpush2.msra.mxu0 0.0
        %634 = vmatprep.mubr.f32.mxu0 0.0
        %635 = vmatmul.mubr.f32.gmra.mxu0 %v562
        %v636 = vpop.f32.mrf.mxu0
        %v637 = vadd.f32 0.0, %v636
        %v638 = vpop.f32.mrf.mxu0
        %v639 = vadd.f32 0.0, %v638
        %640 = vdwg.mxu0
        %641 = vmatprep.subr.mxu0 0.0
        %642 = vmatpush1.msra.mxu0 0.0
        %643 = vmatprep.subr.mxu0 0.0
        %644 = vmatpush1.msra.mxu0 0.0
        %645 = vmatprep.subr.mxu0 0.0
        %646 = vmatpush1.msra.mxu0 0.0
        %647 = vmatprep.subr.mxu0 0.0
        %648 = vmatpush1.msra.mxu0 0.0
        %649 = vmatprep.subr.mxu0 0.0
        %650 = vmatpush1.msra.mxu0 0.0
        %651 = vmatprep.subr.mxu0 0.0
        %652 = vmatpush1.msra.mxu0 0.0
        %653 = vmatprep.subr.mxu0 0.0
        %654 = vmatpush1.msra.mxu0 0.0
        %655 = vmatprep.subr.mxu0 0.0
        %656 = vmatpush1.msra.mxu0 0.0
        %657 = vmatprep.subr.mxu0 0.0
        %658 = vmatpush1.msra.mxu0 0.0
        %659 = vmatprep.subr.mxu0 0.0
        %660 = vmatpush1.msra.mxu0 0.0
        %661 = vmatprep.subr.mxu0 0.0
        %662 = vmatpush1.msra.mxu0 0.0
        %663 = vmatprep.subr.mxu0 0.0
        %664 = vmatpush1.msra.mxu0 0.0
        %665 = vmatprep.subr.mxu0 0.0
        %666 = vmatpush1.msra.mxu0 0.0
        %667 = vmatprep.subr.mxu0 0.0
        %668 = vmatpush1.msra.mxu0 0.0
        %669 = vmatprep.subr.mxu0 0.0
        %670 = vmatpush1.msra.mxu0 0.0
        %671 = vmatprep.subr.mxu0 0.0
        %672 = vmatpush1.msra.mxu0 %v568
        %673 = vmatprep.subr.mxu0 0.0
        %674 = vmatpush2.msra.mxu0 0.0
        %675 = vmatprep.subr.mxu0 0.0
        %676 = vmatpush2.msra.mxu0 0.0
        %677 = vmatprep.subr.mxu0 0.0
        %678 = vmatpush2.msra.mxu0 0.0
        %679 = vmatprep.subr.mxu0 0.0
        %680 = vmatpush2.msra.mxu0 0.0
        %681 = vmatprep.subr.mxu0 0.0
        %682 = vmatpush2.msra.mxu0 0.0
        %683 = vmatprep.subr.mxu0 0.0
        %684 = vmatpush2.msra.mxu0 0.0
        %685 = vmatprep.subr.mxu0 0.0
        %686 = vmatpush2.msra.mxu0 0.0
        %687 = vmatprep.subr.mxu0 0.0
        %688 = vmatpush2.msra.mxu0 0.0
        %689 = vmatprep.subr.mxu0 0.0
        %690 = vmatpush2.msra.mxu0 0.0
        %691 = vmatprep.subr.mxu0 0.0
        %692 = vmatpush2.msra.mxu0 0.0
        %693 = vmatprep.subr.mxu0 0.0
        %694 = vmatpush2.msra.mxu0 0.0
        %695 = vmatprep.subr.mxu0 0.0
        %696 = vmatpush2.msra.mxu0 0.0
        %697 = vmatprep.subr.mxu0 0.0
        %698 = vmatpush2.msra.mxu0 0.0
        %699 = vmatprep.subr.mxu0 0.0
        %700 = vmatpush2.msra.mxu0 0.0
        %701 = vmatprep.subr.mxu0 0.0
        %702 = vmatpush2.msra.mxu0 0.0
        %703 = vmatprep.subr.mxu0 0.0
        %704 = vmatpush2.msra.mxu0 0.0
        %705 = vmatprep.mubr.f32.mxu0 0.0
        %706 = vmatmul.mubr.f32.gmra.mxu0 %v562
        %v707 = vpop.f32.mrf.mxu0
        %v708 = vadd.f32 0.0, %v707
        %v709 = vpop.f32.mrf.mxu0
        %710 = vdwg.mxu0
        %v711 = vadd.f32 %v471, %v637
        %v712 = vadd.f32 %v473, %v639
        %v713 = vadd.f32 %v542, %v708
        %s714 = scalar_lea.vmem %s224, 24
        %v715 = vld [vmem:[%s714] sm:$0xff]
        %v716 = vld [vmem:[%s190] sm:$0xff]
        %v717 = vld [vmem:[%s190 + $0x8] sm:$0xf]
        %v720 = vcombine.high %v716, %v716
        %721 = vrot.lane.b32.xlu0 %v716, 110
        %v722 = vpop.permute.xlu0 %721
        %723 = vrot.lane.b32.xlu0 %v720, 110
        %v724 = vpop.permute.xlu0 %723
        %725 = vrot.lane.b32.xlu0 %v717, 110
        %v726 = vpop.permute.xlu0 %725
        %vm727 = vcmask 900096
        %v728 = vsel %vm727, %v722, %v724
        %v729 = vsel %vm727, %v724, %v726
        %v731 = vsel %vm243, %v715, 0
        %v733 = vsel %vm247, %v728, 0
        %v735 = vsel %vm247, %v729, 0
        %v737 = vsel %vm247, %v726, 0
        %739 = vmatprep.subr.mxu0 0.0
        %740 = vmatpush1.msra.mxu0 0.0
        %741 = vmatprep.subr.mxu0 0.0
        %742 = vmatpush1.msra.mxu0 0.0
        %743 = vmatprep.subr.mxu0 0.0
        %744 = vmatpush1.msra.mxu0 0.0
        %745 = vmatprep.subr.mxu0 0.0
        %746 = vmatpush1.msra.mxu0 0.0
        %747 = vmatprep.subr.mxu0 0.0
        %748 = vmatpush1.msra.mxu0 0.0
        %749 = vmatprep.subr.mxu0 0.0
        %750 = vmatpush1.msra.mxu0 0.0
        %751 = vmatprep.subr.mxu0 0.0
        %752 = vmatpush1.msra.mxu0 0.0
        %753 = vmatprep.subr.mxu0 0.0
        %754 = vmatpush1.msra.mxu0 0.0
        %755 = vmatprep.subr.mxu0 0.0
        %756 = vmatpush1.msra.mxu0 0.0
        %757 = vmatprep.subr.mxu0 0.0
        %758 = vmatpush1.msra.mxu0 0.0
        %759 = vmatprep.subr.mxu0 0.0
        %760 = vmatpush1.msra.mxu0 0.0
        %761 = vmatprep.subr.mxu0 0.0
        %762 = vmatpush1.msra.mxu0 0.0
        %763 = vmatprep.subr.mxu0 0.0
        %764 = vmatpush1.msra.mxu0 0.0
        %765 = vmatprep.subr.mxu0 0.0
        %766 = vmatpush1.msra.mxu0 0.0
        %767 = vmatprep.subr.mxu0 0.0
        %768 = vmatpush1.msra.mxu0 0.0
        %769 = vmatprep.subr.mxu0 %v735
        %770 = vmatpush1.msra.mxu0 %v733
        %771 = vmatprep.subr.mxu0 0.0
        %772 = vmatpush2.msra.mxu0 0.0
        %773 = vmatprep.subr.mxu0 0.0
        %774 = vmatpush2.msra.mxu0 0.0
        %775 = vmatprep.subr.mxu0 0.0
        %776 = vmatpush2.msra.mxu0 0.0
        %777 = vmatprep.subr.mxu0 0.0
        %778 = vmatpush2.msra.mxu0 0.0
        %779 = vmatprep.subr.mxu0 0.0
        %780 = vmatpush2.msra.mxu0 0.0
        %781 = vmatprep.subr.mxu0 0.0
        %782 = vmatpush2.msra.mxu0 0.0
        %783 = vmatprep.subr.mxu0 0.0
        %784 = vmatpush2.msra.mxu0 0.0
        %785 = vmatprep.subr.mxu0 0.0
        %786 = vmatpush2.msra.mxu0 0.0
        %787 = vmatprep.subr.mxu0 0.0
        %788 = vmatpush2.msra.mxu0 0.0
        %789 = vmatprep.subr.mxu0 0.0
        %790 = vmatpush2.msra.mxu0 0.0
        %791 = vmatprep.subr.mxu0 0.0
        %792 = vmatpush2.msra.mxu0 0.0
        %793 = vmatprep.subr.mxu0 0.0
        %794 = vmatpush2.msra.mxu0 0.0
        %795 = vmatprep.subr.mxu0 0.0
        %796 = vmatpush2.msra.mxu0 0.0
        %797 = vmatprep.subr.mxu0 0.0
        %798 = vmatpush2.msra.mxu0 0.0
        %799 = vmatprep.subr.mxu0 0.0
        %800 = vmatpush2.msra.mxu0 0.0
        %801 = vmatprep.subr.mxu0 0.0
        %802 = vmatpush2.msra.mxu0 0.0
        %803 = vmatprep.mubr.f32.mxu0 0.0
        %804 = vmatmul.mubr.f32.gmra.mxu0 %v731
        %v805 = vpop.f32.mrf.mxu0
        %v806 = vadd.f32 0.0, %v805
        %v807 = vpop.f32.mrf.mxu0
        %v808 = vadd.f32 0.0, %v807
        %809 = vdwg.mxu0
        %810 = vmatprep.subr.mxu0 0.0
        %811 = vmatpush1.msra.mxu0 0.0
        %812 = vmatprep.subr.mxu0 0.0
        %813 = vmatpush1.msra.mxu0 0.0
        %814 = vmatprep.subr.mxu0 0.0
        %815 = vmatpush1.msra.mxu0 0.0
        %816 = vmatprep.subr.mxu0 0.0
        %817 = vmatpush1.msra.mxu0 0.0
        %818 = vmatprep.subr.mxu0 0.0
        %819 = vmatpush1.msra.mxu0 0.0
        %820 = vmatprep.subr.mxu0 0.0
        %821 = vmatpush1.msra.mxu0 0.0
        %822 = vmatprep.subr.mxu0 0.0
        %823 = vmatpush1.msra.mxu0 0.0
        %824 = vmatprep.subr.mxu0 0.0
        %825 = vmatpush1.msra.mxu0 0.0
        %826 = vmatprep.subr.mxu0 0.0
        %827 = vmatpush1.msra.mxu0 0.0
        %828 = vmatprep.subr.mxu0 0.0
        %829 = vmatpush1.msra.mxu0 0.0
        %830 = vmatprep.subr.mxu0 0.0
        %831 = vmatpush1.msra.mxu0 0.0
        %832 = vmatprep.subr.mxu0 0.0
        %833 = vmatpush1.msra.mxu0 0.0
        %834 = vmatprep.subr.mxu0 0.0
        %835 = vmatpush1.msra.mxu0 0.0
        %836 = vmatprep.subr.mxu0 0.0
        %837 = vmatpush1.msra.mxu0 0.0
        %838 = vmatprep.subr.mxu0 0.0
        %839 = vmatpush1.msra.mxu0 0.0
        %840 = vmatprep.subr.mxu0 0.0
        %841 = vmatpush1.msra.mxu0 %v737
        %842 = vmatprep.subr.mxu0 0.0
        %843 = vmatpush2.msra.mxu0 0.0
        %844 = vmatprep.subr.mxu0 0.0
        %845 = vmatpush2.msra.mxu0 0.0
        %846 = vmatprep.subr.mxu0 0.0
        %847 = vmatpush2.msra.mxu0 0.0
        %848 = vmatprep.subr.mxu0 0.0
        %849 = vmatpush2.msra.mxu0 0.0
        %850 = vmatprep.subr.mxu0 0.0
        %851 = vmatpush2.msra.mxu0 0.0
        %852 = vmatprep.subr.mxu0 0.0
        %853 = vmatpush2.msra.mxu0 0.0
        %854 = vmatprep.subr.mxu0 0.0
        %855 = vmatpush2.msra.mxu0 0.0
        %856 = vmatprep.subr.mxu0 0.0
        %857 = vmatpush2.msra.mxu0 0.0
        %858 = vmatprep.subr.mxu0 0.0
        %859 = vmatpush2.msra.mxu0 0.0
        %860 = vmatprep.subr.mxu0 0.0
        %861 = vmatpush2.msra.mxu0 0.0
        %862 = vmatprep.subr.mxu0 0.0
        %863 = vmatpush2.msra.mxu0 0.0
        %864 = vmatprep.subr.mxu0 0.0
        %865 = vmatpush2.msra.mxu0 0.0
        %866 = vmatprep.subr.mxu0 0.0
        %867 = vmatpush2.msra.mxu0 0.0
        %868 = vmatprep.subr.mxu0 0.0
        %869 = vmatpush2.msra.mxu0 0.0
        %870 = vmatprep.subr.mxu0 0.0
        %871 = vmatpush2.msra.mxu0 0.0
        %872 = vmatprep.subr.mxu0 0.0
        %873 = vmatpush2.msra.mxu0 0.0
        %874 = vmatprep.mubr.f32.mxu0 0.0
        %875 = vmatmul.mubr.f32.gmra.mxu0 %v731
        %v876 = vpop.f32.mrf.mxu0
        %v877 = vadd.f32 0.0, %v876
        %v878 = vpop.f32.mrf.mxu0
        %879 = vdwg.mxu0
        %v880 = vadd.f32 %v711, %v806
        %v881 = vadd.f32 %v712, %v808
        %v882 = vadd.f32 %v713, %v877
        %s883 = scalar_lea.vmem %s224, 32
        %v884 = vld [vmem:[%s883] sm:$0xff]
        %v885 = vld [vmem:[%s190] sm:$0xff]
        %v886 = vld [vmem:[%s190 + $0x8] sm:$0xf]
        %v889 = vcombine.high %v885, %v885
        %890 = vrot.lane.b32.xlu0 %v885, 109
        %v891 = vpop.permute.xlu0 %890
        %892 = vrot.lane.b32.xlu0 %v889, 109
        %v893 = vpop.permute.xlu0 %892
        %894 = vrot.lane.b32.xlu0 %v886, 109
        %v895 = vpop.permute.xlu0 %894
        %vm896 = vcmask 891904
        %v897 = vsel %vm896, %v891, %v893
        %v898 = vsel %vm896, %v893, %v895
        %v900 = vsel %vm243, %v884, 0
        %v902 = vsel %vm247, %v897, 0
        %v904 = vsel %vm247, %v898, 0
        %v906 = vsel %vm247, %v895, 0
        %908 = vmatprep.subr.mxu0 0.0
        %909 = vmatpush1.msra.mxu0 0.0
        %910 = vmatprep.subr.mxu0 0.0
        %911 = vmatpush1.msra.mxu0 0.0
        %912 = vmatprep.subr.mxu0 0.0
        %913 = vmatpush1.msra.mxu0 0.0
        %914 = vmatprep.subr.mxu0 0.0
        %915 = vmatpush1.msra.mxu0 0.0
        %916 = vmatprep.subr.mxu0 0.0
        %917 = vmatpush1.msra.mxu0 0.0
        %918 = vmatprep.subr.mxu0 0.0
        %919 = vmatpush1.msra.mxu0 0.0
        %920 = vmatprep.subr.mxu0 0.0
        %921 = vmatpush1.msra.mxu0 0.0
        %922 = vmatprep.subr.mxu0 0.0
        %923 = vmatpush1.msra.mxu0 0.0
        %924 = vmatprep.subr.mxu0 0.0
        %925 = vmatpush1.msra.mxu0 0.0
        %926 = vmatprep.subr.mxu0 0.0
        %927 = vmatpush1.msra.mxu0 0.0
        %928 = vmatprep.subr.mxu0 0.0
        %929 = vmatpush1.msra.mxu0 0.0
        %930 = vmatprep.subr.mxu0 0.0
        %931 = vmatpush1.msra.mxu0 0.0
        %932 = vmatprep.subr.mxu0 0.0
        %933 = vmatpush1.msra.mxu0 0.0
        %934 = vmatprep.subr.mxu0 0.0
        %935 = vmatpush1.msra.mxu0 0.0
        %936 = vmatprep.subr.mxu0 0.0
        %937 = vmatpush1.msra.mxu0 0.0
        %938 = vmatprep.subr.mxu0 %v904
        %939 = vmatpush1.msra.mxu0 %v902
        %940 = vmatprep.subr.mxu0 0.0
        %941 = vmatpush2.msra.mxu0 0.0
        %942 = vmatprep.subr.mxu0 0.0
        %943 = vmatpush2.msra.mxu0 0.0
        %944 = vmatprep.subr.mxu0 0.0
        %945 = vmatpush2.msra.mxu0 0.0
        %946 = vmatprep.subr.mxu0 0.0
        %947 = vmatpush2.msra.mxu0 0.0
        %948 = vmatprep.subr.mxu0 0.0
        %949 = vmatpush2.msra.mxu0 0.0
        %950 = vmatprep.subr.mxu0 0.0
        %951 = vmatpush2.msra.mxu0 0.0
        %952 = vmatprep.subr.mxu0 0.0
        %953 = vmatpush2.msra.mxu0 0.0
        %954 = vmatprep.subr.mxu0 0.0
        %955 = vmatpush2.msra.mxu0 0.0
        %956 = vmatprep.subr.mxu0 0.0
        %957 = vmatpush2.msra.mxu0 0.0
        %958 = vmatprep.subr.mxu0 0.0
        %959 = vmatpush2.msra.mxu0 0.0
        %960 = vmatprep.subr.mxu0 0.0
        %961 = vmatpush2.msra.mxu0 0.0
        %962 = vmatprep.subr.mxu0 0.0
        %963 = vmatpush2.msra.mxu0 0.0
        %964 = vmatprep.subr.mxu0 0.0
        %965 = vmatpush2.msra.mxu0 0.0
        %966 = vmatprep.subr.mxu0 0.0
        %967 = vmatpush2.msra.mxu0 0.0
        %968 = vmatprep.subr.mxu0 0.0
        %969 = vmatpush2.msra.mxu0 0.0
        %970 = vmatprep.subr.mxu0 0.0
        %971 = vmatpush2.msra.mxu0 0.0
        %972 = vmatprep.mubr.f32.mxu0 0.0
        %973 = vmatmul.mubr.f32.gmra.mxu0 %v900
        %v974 = vpop.f32.mrf.mxu0
        %v975 = vadd.f32 0.0, %v974
        %v976 = vpop.f32.mrf.mxu0
        %v977 = vadd.f32 0.0, %v976
        %978 = vdwg.mxu0
        %979 = vmatprep.subr.mxu0 0.0
        %980 = vmatpush1.msra.mxu0 0.0
        %981 = vmatprep.subr.mxu0 0.0
        %982 = vmatpush1.msra.mxu0 0.0
        %983 = vmatprep.subr.mxu0 0.0
        %984 = vmatpush1.msra.mxu0 0.0
        %985 = vmatprep.subr.mxu0 0.0
        %986 = vmatpush1.msra.mxu0 0.0
        %987 = vmatprep.subr.mxu0 0.0
        %988 = vmatpush1.msra.mxu0 0.0
        %989 = vmatprep.subr.mxu0 0.0
        %990 = vmatpush1.msra.mxu0 0.0
        %991 = vmatprep.subr.mxu0 0.0
        %992 = vmatpush1.msra.mxu0 0.0
        %993 = vmatprep.subr.mxu0 0.0
        %994 = vmatpush1.msra.mxu0 0.0
        %995 = vmatprep.subr.mxu0 0.0
        %996 = vmatpush1.msra.mxu0 0.0
        %997 = vmatprep.subr.mxu0 0.0
        %998 = vmatpush1.msra.mxu0 0.0
        %999 = vmatprep.subr.mxu0 0.0
        %1000 = vmatpush1.msra.mxu0 0.0
        %1001 = vmatprep.subr.mxu0 0.0
        %1002 = vmatpush1.msra.mxu0 0.0
        %1003 = vmatprep.subr.mxu0 0.0
        %1004 = vmatpush1.msra.mxu0 0.0
        %1005 = vmatprep.subr.mxu0 0.0
        %1006 = vmatpush1.msra.mxu0 0.0
        %1007 = vmatprep.subr.mxu0 0.0
        %1008 = vmatpush1.msra.mxu0 0.0
        %1009 = vmatprep.subr.mxu0 0.0
        %1010 = vmatpush1.msra.mxu0 %v906
        %1011 = vmatprep.subr.mxu0 0.0
        %1012 = vmatpush2.msra.mxu0 0.0
        %1013 = vmatprep.subr.mxu0 0.0
        %1014 = vmatpush2.msra.mxu0 0.0
        %1015 = vmatprep.subr.mxu0 0.0
        %1016 = vmatpush2.msra.mxu0 0.0
        %1017 = vmatprep.subr.mxu0 0.0
        %1018 = vmatpush2.msra.mxu0 0.0
        %1019 = vmatprep.subr.mxu0 0.0
        %1020 = vmatpush2.msra.mxu0 0.0
        %1021 = vmatprep.subr.mxu0 0.0
        %1022 = vmatpush2.msra.mxu0 0.0
        %1023 = vmatprep.subr.mxu0 0.0
        %1024 = vmatpush2.msra.mxu0 0.0
        %1025 = vmatprep.subr.mxu0 0.0
        %1026 = vmatpush2.msra.mxu0 0.0
        %1027 = vmatprep.subr.mxu0 0.0
        %1028 = vmatpush2.msra.mxu0 0.0
        %1029 = vmatprep.subr.mxu0 0.0
        %1030 = vmatpush2.msra.mxu0 0.0
        %1031 = vmatprep.subr.mxu0 0.0
        %1032 = vmatpush2.msra.mxu0 0.0
        %1033 = vmatprep.subr.mxu0 0.0
        %1034 = vmatpush2.msra.mxu0 0.0
        %1035 = vmatprep.subr.mxu0 0.0
        %1036 = vmatpush2.msra.mxu0 0.0
        %1037 = vmatprep.subr.mxu0 0.0
        %1038 = vmatpush2.msra.mxu0 0.0
        %1039 = vmatprep.subr.mxu0 0.0
        %1040 = vmatpush2.msra.mxu0 0.0
        %1041 = vmatprep.subr.mxu0 0.0
        %1042 = vmatpush2.msra.mxu0 0.0
        %1043 = vmatprep.mubr.f32.mxu0 0.0
        %1044 = vmatmul.mubr.f32.gmra.mxu0 %v900
        %v1045 = vpop.f32.mrf.mxu0
        %v1046 = vadd.f32 0.0, %v1045
        %v1047 = vpop.f32.mrf.mxu0
        %1048 = vdwg.mxu0
        %v1049 = vadd.f32 %v880, %v975
        %v1050 = vadd.f32 %v881, %v977
        %v1051 = vadd.f32 %v882, %v1046
        %s1052 = scalar_lea.vmem %s224, 40
        %v1053 = vld [vmem:[%s1052] sm:$0xff]
        %v1054 = vld [vmem:[%s190] sm:$0xff]
        %v1055 = vld [vmem:[%s190 + $0x8] sm:$0xf]
        %v1058 = vcombine.high %v1054, %v1054
        %1059 = vrot.lane.b32.xlu0 %v1054, 108
        %v1060 = vpop.permute.xlu0 %1059
        %1061 = vrot.lane.b32.xlu0 %v1058, 108
        %v1062 = vpop.permute.xlu0 %1061
        %1063 = vrot.lane.b32.xlu0 %v1055, 108
        %v1064 = vpop.permute.xlu0 %1063
        %vm1065 = vcmask 883712
        %v1066 = vsel %vm1065, %v1060, %v1062
        %v1067 = vsel %vm1065, %v1062, %v1064
        %v1069 = vsel %vm243, %v1053, 0
        %v1071 = vsel %vm247, %v1066, 0
        %v1073 = vsel %vm247, %v1067, 0
        %v1075 = vsel %vm247, %v1064, 0
        %1077 = vmatprep.subr.mxu0 0.0
        %1078 = vmatpush1.msra.mxu0 0.0
        %1079 = vmatprep.subr.mxu0 0.0
        %1080 = vmatpush1.msra.mxu0 0.0
        %1081 = vmatprep.subr.mxu0 0.0
        %1082 = vmatpush1.msra.mxu0 0.0
        %1083 = vmatprep.subr.mxu0 0.0
        %1084 = vmatpush1.msra.mxu0 0.0
        %1085 = vmatprep.subr.mxu0 0.0
        %1086 = vmatpush1.msra.mxu0 0.0
        %1087 = vmatprep.subr.mxu0 0.0
        %1088 = vmatpush1.msra.mxu0 0.0
        %1089 = vmatprep.subr.mxu0 0.0
        %1090 = vmatpush1.msra.mxu0 0.0
        %1091 = vmatprep.subr.mxu0 0.0
        %1092 = vmatpush1.msra.mxu0 0.0
        %1093 = vmatprep.subr.mxu0 0.0
        %1094 = vmatpush1.msra.mxu0 0.0
        %1095 = vmatprep.subr.mxu0 0.0
        %1096 = vmatpush1.msra.mxu0 0.0
        %1097 = vmatprep.subr.mxu0 0.0
        %1098 = vmatpush1.msra.mxu0 0.0
        %1099 = vmatprep.subr.mxu0 0.0
        %1100 = vmatpush1.msra.mxu0 0.0
        %1101 = vmatprep.subr.mxu0 0.0
        %1102 = vmatpush1.msra.mxu0 0.0
        %1103 = vmatprep.subr.mxu0 0.0
        %1104 = vmatpush1.msra.mxu0 0.0
        %1105 = vmatprep.subr.mxu0 0.0
        %1106 = vmatpush1.msra.mxu0 0.0
        %1107 = vmatprep.subr.mxu0 %v1073
        %1108 = vmatpush1.msra.mxu0 %v1071
        %1109 = vmatprep.subr.mxu0 0.0
        %1110 = vmatpush2.msra.mxu0 0.0
        %1111 = vmatprep.subr.mxu0 0.0
        %1112 = vmatpush2.msra.mxu0 0.0
        %1113 = vmatprep.subr.mxu0 0.0
        %1114 = vmatpush2.msra.mxu0 0.0
        %1115 = vmatprep.subr.mxu0 0.0
        %1116 = vmatpush2.msra.mxu0 0.0
        %1117 = vmatprep.subr.mxu0 0.0
        %1118 = vmatpush2.msra.mxu0 0.0
        %1119 = vmatprep.subr.mxu0 0.0
        %1120 = vmatpush2.msra.mxu0 0.0
        %1121 = vmatprep.subr.mxu0 0.0
        %1122 = vmatpush2.msra.mxu0 0.0
        %1123 = vmatprep.subr.mxu0 0.0
        %1124 = vmatpush2.msra.mxu0 0.0
        %1125 = vmatprep.subr.mxu0 0.0
        %1126 = vmatpush2.msra.mxu0 0.0
        %1127 = vmatprep.subr.mxu0 0.0
        %1128 = vmatpush2.msra.mxu0 0.0
        %1129 = vmatprep.subr.mxu0 0.0
        %1130 = vmatpush2.msra.mxu0 0.0
        %1131 = vmatprep.subr.mxu0 0.0
        %1132 = vmatpush2.msra.mxu0 0.0
        %1133 = vmatprep.subr.mxu0 0.0
        %1134 = vmatpush2.msra.mxu0 0.0
        %1135 = vmatprep.subr.mxu0 0.0
        %1136 = vmatpush2.msra.mxu0 0.0
        %1137 = vmatprep.subr.mxu0 0.0
        %1138 = vmatpush2.msra.mxu0 0.0
        %1139 = vmatprep.subr.mxu0 0.0
        %1140 = vmatpush2.msra.mxu0 0.0
        %1141 = vmatprep.mubr.f32.mxu0 0.0
        %1142 = vmatmul.mubr.f32.gmra.mxu0 %v1069
        %v1143 = vpop.f32.mrf.mxu0
        %v1144 = vadd.f32 0.0, %v1143
        %v1145 = vpop.f32.mrf.mxu0
        %v1146 = vadd.f32 0.0, %v1145
        %1147 = vdwg.mxu0
        %1148 = vmatprep.subr.mxu0 0.0
        %1149 = vmatpush1.msra.mxu0 0.0
        %1150 = vmatprep.subr.mxu0 0.0
        %1151 = vmatpush1.msra.mxu0 0.0
        %1152 = vmatprep.subr.mxu0 0.0
        %1153 = vmatpush1.msra.mxu0 0.0
        %1154 = vmatprep.subr.mxu0 0.0
        %1155 = vmatpush1.msra.mxu0 0.0
        %1156 = vmatprep.subr.mxu0 0.0
        %1157 = vmatpush1.msra.mxu0 0.0
        %1158 = vmatprep.subr.mxu0 0.0
        %1159 = vmatpush1.msra.mxu0 0.0
        %1160 = vmatprep.subr.mxu0 0.0
        %1161 = vmatpush1.msra.mxu0 0.0
        %1162 = vmatprep.subr.mxu0 0.0
        %1163 = vmatpush1.msra.mxu0 0.0
        %1164 = vmatprep.subr.mxu0 0.0
        %1165 = vmatpush1.msra.mxu0 0.0
        %1166 = vmatprep.subr.mxu0 0.0
        %1167 = vmatpush1.msra.mxu0 0.0
        %1168 = vmatprep.subr.mxu0 0.0
        %1169 = vmatpush1.msra.mxu0 0.0
        %1170 = vmatprep.subr.mxu0 0.0
        %1171 = vmatpush1.msra.mxu0 0.0
        %1172 = vmatprep.subr.mxu0 0.0
        %1173 = vmatpush1.msra.mxu0 0.0
        %1174 = vmatprep.subr.mxu0 0.0
        %1175 = vmatpush1.msra.mxu0 0.0
        %1176 = vmatprep.subr.mxu0 0.0
        %1177 = vmatpush1.msra.mxu0 0.0
        %1178 = vmatprep.subr.mxu0 0.0
        %1179 = vmatpush1.msra.mxu0 %v1075
        %1180 = vmatprep.subr.mxu0 0.0
        %1181 = vmatpush2.msra.mxu0 0.0
        %1182 = vmatprep.subr.mxu0 0.0
        %1183 = vmatpush2.msra.mxu0 0.0
        %1184 = vmatprep.subr.mxu0 0.0
        %1185 = vmatpush2.msra.mxu0 0.0
        %1186 = vmatprep.subr.mxu0 0.0
        %1187 = vmatpush2.msra.mxu0 0.0
        %1188 = vmatprep.subr.mxu0 0.0
        %1189 = vmatpush2.msra.mxu0 0.0
        %1190 = vmatprep.subr.mxu0 0.0
        %1191 = vmatpush2.msra.mxu0 0.0
        %1192 = vmatprep.subr.mxu0 0.0
        %1193 = vmatpush2.msra.mxu0 0.0
        %1194 = vmatprep.subr.mxu0 0.0
        %1195 = vmatpush2.msra.mxu0 0.0
        %1196 = vmatprep.subr.mxu0 0.0
        %1197 = vmatpush2.msra.mxu0 0.0
        %1198 = vmatprep.subr.mxu0 0.0
        %1199 = vmatpush2.msra.mxu0 0.0
        %1200 = vmatprep.subr.mxu0 0.0
        %1201 = vmatpush2.msra.mxu0 0.0
        %1202 = vmatprep.subr.mxu0 0.0
        %1203 = vmatpush2.msra.mxu0 0.0
        %1204 = vmatprep.subr.mxu0 0.0
        %1205 = vmatpush2.msra.mxu0 0.0
        %1206 = vmatprep.subr.mxu0 0.0
        %1207 = vmatpush2.msra.mxu0 0.0
        %1208 = vmatprep.subr.mxu0 0.0
        %1209 = vmatpush2.msra.mxu0 0.0
        %1210 = vmatprep.subr.mxu0 0.0
        %1211 = vmatpush2.msra.mxu0 0.0
        %1212 = vmatprep.mubr.f32.mxu0 0.0
        %1213 = vmatmul.mubr.f32.gmra.mxu0 %v1069
        %v1214 = vpop.f32.mrf.mxu0
        %v1215 = vadd.f32 0.0, %v1214
        %v1216 = vpop.f32.mrf.mxu0
        %1217 = vdwg.mxu0
        %v1218 = vadd.f32 %v1049, %v1144
        %v1219 = vadd.f32 %v1050, %v1146
        %v1220 = vadd.f32 %v1051, %v1215
        %s1221 = scalar_lea.vmem %s224, 48
        %v1222 = vld [vmem:[%s1221] sm:$0xff]
        %v1223 = vld [vmem:[%s190] sm:$0xff]
        %v1224 = vld [vmem:[%s190 + $0x8] sm:$0xf]
        %v1227 = vcombine.high %v1223, %v1223
        %1228 = vrot.lane.b32.xlu0 %v1223, 92
        %v1229 = vpop.permute.xlu0 %1228
        %1230 = vrot.lane.b32.xlu0 %v1227, 92
        %v1231 = vpop.permute.xlu0 %1230
        %1232 = vrot.lane.b32.xlu0 %v1224, 92
        %v1233 = vpop.permute.xlu0 %1232
        %vm1234 = vcmask 752640
        %v1235 = vsel %vm1234, %v1229, %v1231
        %v1236 = vsel %vm1234, %v1231, %v1233
        %v1238 = vsel %vm243, %v1222, 0
        %v1240 = vsel %vm247, %v1235, 0
        %v1242 = vsel %vm247, %v1236, 0
        %v1244 = vsel %vm247, %v1233, 0
        %1246 = vmatprep.subr.mxu0 0.0
        %1247 = vmatpush1.msra.mxu0 0.0
        %1248 = vmatprep.subr.mxu0 0.0
        %1249 = vmatpush1.msra.mxu0 0.0
        %1250 = vmatprep.subr.mxu0 0.0
        %1251 = vmatpush1.msra.mxu0 0.0
        %1252 = vmatprep.subr.mxu0 0.0
        %1253 = vmatpush1.msra.mxu0 0.0
        %1254 = vmatprep.subr.mxu0 0.0
        %1255 = vmatpush1.msra.mxu0 0.0
        %1256 = vmatprep.subr.mxu0 0.0
        %1257 = vmatpush1.msra.mxu0 0.0
        %1258 = vmatprep.subr.mxu0 0.0
        %1259 = vmatpush1.msra.mxu0 0.0
        %1260 = vmatprep.subr.mxu0 0.0
        %1261 = vmatpush1.msra.mxu0 0.0
        %1262 = vmatprep.subr.mxu0 0.0
        %1263 = vmatpush1.msra.mxu0 0.0
        %1264 = vmatprep.subr.mxu0 0.0
        %1265 = vmatpush1.msra.mxu0 0.0
        %1266 = vmatprep.subr.mxu0 0.0
        %1267 = vmatpush1.msra.mxu0 0.0
        %1268 = vmatprep.subr.mxu0 0.0
        %1269 = vmatpush1.msra.mxu0 0.0
        %1270 = vmatprep.subr.mxu0 0.0
        %1271 = vmatpush1.msra.mxu0 0.0
        %1272 = vmatprep.subr.mxu0 0.0
        %1273 = vmatpush1.msra.mxu0 0.0
        %1274 = vmatprep.subr.mxu0 0.0
        %1275 = vmatpush1.msra.mxu0 0.0
        %1276 = vmatprep.subr.mxu0 %v1242
        %1277 = vmatpush1.msra.mxu0 %v1240
        %1278 = vmatprep.subr.mxu0 0.0
        %1279 = vmatpush2.msra.mxu0 0.0
        %1280 = vmatprep.subr.mxu0 0.0
        %1281 = vmatpush2.msra.mxu0 0.0
        %1282 = vmatprep.subr.mxu0 0.0
        %1283 = vmatpush2.msra.mxu0 0.0
        %1284 = vmatprep.subr.mxu0 0.0
        %1285 = vmatpush2.msra.mxu0 0.0
        %1286 = vmatprep.subr.mxu0 0.0
        %1287 = vmatpush2.msra.mxu0 0.0
        %1288 = vmatprep.subr.mxu0 0.0
        %1289 = vmatpush2.msra.mxu0 0.0
        %1290 = vmatprep.subr.mxu0 0.0
        %1291 = vmatpush2.msra.mxu0 0.0
        %1292 = vmatprep.subr.mxu0 0.0
        %1293 = vmatpush2.msra.mxu0 0.0
        %1294 = vmatprep.subr.mxu0 0.0
        %1295 = vmatpush2.msra.mxu0 0.0
        %1296 = vmatprep.subr.mxu0 0.0
        %1297 = vmatpush2.msra.mxu0 0.0
        %1298 = vmatprep.subr.mxu0 0.0
        %1299 = vmatpush2.msra.mxu0 0.0
        %1300 = vmatprep.subr.mxu0 0.0
        %1301 = vmatpush2.msra.mxu0 0.0
        %1302 = vmatprep.subr.mxu0 0.0
        %1303 = vmatpush2.msra.mxu0 0.0
        %1304 = vmatprep.subr.mxu0 0.0
        %1305 = vmatpush2.msra.mxu0 0.0
        %1306 = vmatprep.subr.mxu0 0.0
        %1307 = vmatpush2.msra.mxu0 0.0
        %1308 = vmatprep.subr.mxu0 0.0
        %1309 = vmatpush2.msra.mxu0 0.0
        %1310 = vmatprep.mubr.f32.mxu0 0.0
        %1311 = vmatmul.mubr.f32.gmra.mxu0 %v1238
        %v1312 = vpop.f32.mrf.mxu0
        %v1313 = vadd.f32 0.0, %v1312
        %v1314 = vpop.f32.mrf.mxu0
        %v1315 = vadd.f32 0.0, %v1314
        %1316 = vdwg.mxu0
        %1317 = vmatprep.subr.mxu0 0.0
        %1318 = vmatpush1.msra.mxu0 0.0
        %1319 = vmatprep.subr.mxu0 0.0
        %1320 = vmatpush1.msra.mxu0 0.0
        %1321 = vmatprep.subr.mxu0 0.0
        %1322 = vmatpush1.msra.mxu0 0.0
        %1323 = vmatprep.subr.mxu0 0.0
        %1324 = vmatpush1.msra.mxu0 0.0
        %1325 = vmatprep.subr.mxu0 0.0
        %1326 = vmatpush1.msra.mxu0 0.0
        %1327 = vmatprep.subr.mxu0 0.0
        %1328 = vmatpush1.msra.mxu0 0.0
        %1329 = vmatprep.subr.mxu0 0.0
        %1330 = vmatpush1.msra.mxu0 0.0
        %1331 = vmatprep.subr.mxu0 0.0
        %1332 = vmatpush1.msra.mxu0 0.0
        %1333 = vmatprep.subr.mxu0 0.0
        %1334 = vmatpush1.msra.mxu0 0.0
        %1335 = vmatprep.subr.mxu0 0.0
        %1336 = vmatpush1.msra.mxu0 0.0
        %1337 = vmatprep.subr.mxu0 0.0
        %1338 = vmatpush1.msra.mxu0 0.0
        %1339 = vmatprep.subr.mxu0 0.0
        %1340 = vmatpush1.msra.mxu0 0.0
        %1341 = vmatprep.subr.mxu0 0.0
        %1342 = vmatpush1.msra.mxu0 0.0
        %1343 = vmatprep.subr.mxu0 0.0
        %1344 = vmatpush1.msra.mxu0 0.0
        %1345 = vmatprep.subr.mxu0 0.0
        %1346 = vmatpush1.msra.mxu0 0.0
        %1347 = vmatprep.subr.mxu0 0.0
        %1348 = vmatpush1.msra.mxu0 %v1244
        %1349 = vmatprep.subr.mxu0 0.0
        %1350 = vmatpush2.msra.mxu0 0.0
        %1351 = vmatprep.subr.mxu0 0.0
        %1352 = vmatpush2.msra.mxu0 0.0
        %1353 = vmatprep.subr.mxu0 0.0
        %1354 = vmatpush2.msra.mxu0 0.0
        %1355 = vmatprep.subr.mxu0 0.0
        %1356 = vmatpush2.msra.mxu0 0.0
        %1357 = vmatprep.subr.mxu0 0.0
        %1358 = vmatpush2.msra.mxu0 0.0
        %1359 = vmatprep.subr.mxu0 0.0
        %1360 = vmatpush2.msra.mxu0 0.0
        %1361 = vmatprep.subr.mxu0 0.0
        %1362 = vmatpush2.msra.mxu0 0.0
        %1363 = vmatprep.subr.mxu0 0.0
        %1364 = vmatpush2.msra.mxu0 0.0
        %1365 = vmatprep.subr.mxu0 0.0
        %1366 = vmatpush2.msra.mxu0 0.0
        %1367 = vmatprep.subr.mxu0 0.0
        %1368 = vmatpush2.msra.mxu0 0.0
        %1369 = vmatprep.subr.mxu0 0.0
        %1370 = vmatpush2.msra.mxu0 0.0
        %1371 = vmatprep.subr.mxu0 0.0
        %1372 = vmatpush2.msra.mxu0 0.0
        %1373 = vmatprep.subr.mxu0 0.0
        %1374 = vmatpush2.msra.mxu0 0.0
        %1375 = vmatprep.subr.mxu0 0.0
        %1376 = vmatpush2.msra.mxu0 0.0
        %1377 = vmatprep.subr.mxu0 0.0
        %1378 = vmatpush2.msra.mxu0 0.0
        %1379 = vmatprep.subr.mxu0 0.0
        %1380 = vmatpush2.msra.mxu0 0.0
        %1381 = vmatprep.mubr.f32.mxu0 0.0
        %1382 = vmatmul.mubr.f32.gmra.mxu0 %v1238
        %v1383 = vpop.f32.mrf.mxu0
        %v1384 = vadd.f32 0.0, %v1383
        %v1385 = vpop.f32.mrf.mxu0
        %1386 = vdwg.mxu0
        %v1387 = vadd.f32 %v1218, %v1313
        %v1388 = vadd.f32 %v1219, %v1315
        %v1389 = vadd.f32 %v1220, %v1384
        %s1390 = scalar_lea.vmem %s224, 56
        %v1391 = vld [vmem:[%s1390] sm:$0xff]
        %v1392 = vld [vmem:[%s190] sm:$0xff]
        %v1393 = vld [vmem:[%s190 + $0x8] sm:$0xf]
        %v1396 = vcombine.high %v1392, %v1392
        %1397 = vrot.lane.b32.xlu0 %v1392, 91
        %v1398 = vpop.permute.xlu0 %1397
        %1399 = vrot.lane.b32.xlu0 %v1396, 91
        %v1400 = vpop.permute.xlu0 %1399
        %1401 = vrot.lane.b32.xlu0 %v1393, 91
        %v1402 = vpop.permute.xlu0 %1401
        %vm1403 = vcmask 744448
        %v1404 = vsel %vm1403, %v1398, %v1400
        %v1405 = vsel %vm1403, %v1400, %v1402
        %v1407 = vsel %vm243, %v1391, 0
        %v1409 = vsel %vm247, %v1404, 0
        %v1411 = vsel %vm247, %v1405, 0
        %v1413 = vsel %vm247, %v1402, 0
        %1415 = vmatprep.subr.mxu0 0.0
        %1416 = vmatpush1.msra.mxu0 0.0
        %1417 = vmatprep.subr.mxu0 0.0
        %1418 = vmatpush1.msra.mxu0 0.0
        %1419 = vmatprep.subr.mxu0 0.0
        %1420 = vmatpush1.msra.mxu0 0.0
        %1421 = vmatprep.subr.mxu0 0.0
        %1422 = vmatpush1.msra.mxu0 0.0
        %1423 = vmatprep.subr.mxu0 0.0
        %1424 = vmatpush1.msra.mxu0 0.0
        %1425 = vmatprep.subr.mxu0 0.0
        %1426 = vmatpush1.msra.mxu0 0.0
        %1427 = vmatprep.subr.mxu0 0.0
        %1428 = vmatpush1.msra.mxu0 0.0
        %1429 = vmatprep.subr.mxu0 0.0
        %1430 = vmatpush1.msra.mxu0 0.0
        %1431 = vmatprep.subr.mxu0 0.0
        %1432 = vmatpush1.msra.mxu0 0.0
        %1433 = vmatprep.subr.mxu0 0.0
        %1434 = vmatpush1.msra.mxu0 0.0
        %1435 = vmatprep.subr.mxu0 0.0
        %1436 = vmatpush1.msra.mxu0 0.0
        %1437 = vmatprep.subr.mxu0 0.0
        %1438 = vmatpush1.msra.mxu0 0.0
        %1439 = vmatprep.subr.mxu0 0.0
        %1440 = vmatpush1.msra.mxu0 0.0
        %1441 = vmatprep.subr.mxu0 0.0
        %1442 = vmatpush1.msra.mxu0 0.0
        %1443 = vmatprep.subr.mxu0 0.0
        %1444 = vmatpush1.msra.mxu0 0.0
        %1445 = vmatprep.subr.mxu0 %v1411
        %1446 = vmatpush1.msra.mxu0 %v1409
        %1447 = vmatprep.subr.mxu0 0.0
        %1448 = vmatpush2.msra.mxu0 0.0
        %1449 = vmatprep.subr.mxu0 0.0
        %1450 = vmatpush2.msra.mxu0 0.0
        %1451 = vmatprep.subr.mxu0 0.0
        %1452 = vmatpush2.msra.mxu0 0.0
        %1453 = vmatprep.subr.mxu0 0.0
        %1454 = vmatpush2.msra.mxu0 0.0
        %1455 = vmatprep.subr.mxu0 0.0
        %1456 = vmatpush2.msra.mxu0 0.0
        %1457 = vmatprep.subr.mxu0 0.0
        %1458 = vmatpush2.msra.mxu0 0.0
        %1459 = vmatprep.subr.mxu0 0.0
        %1460 = vmatpush2.msra.mxu0 0.0
        %1461 = vmatprep.subr.mxu0 0.0
        %1462 = vmatpush2.msra.mxu0 0.0
        %1463 = vmatprep.subr.mxu0 0.0
        %1464 = vmatpush2.msra.mxu0 0.0
        %1465 = vmatprep.subr.mxu0 0.0
        %1466 = vmatpush2.msra.mxu0 0.0
        %1467 = vmatprep.subr.mxu0 0.0
        %1468 = vmatpush2.msra.mxu0 0.0
        %1469 = vmatprep.subr.mxu0 0.0
        %1470 = vmatpush2.msra.mxu0 0.0
        %1471 = vmatprep.subr.mxu0 0.0
        %1472 = vmatpush2.msra.mxu0 0.0
        %1473 = vmatprep.subr.mxu0 0.0
        %1474 = vmatpush2.msra.mxu0 0.0
        %1475 = vmatprep.subr.mxu0 0.0
        %1476 = vmatpush2.msra.mxu0 0.0
        %1477 = vmatprep.subr.mxu0 0.0
        %1478 = vmatpush2.msra.mxu0 0.0
        %1479 = vmatprep.mubr.f32.mxu0 0.0
        %1480 = vmatmul.mubr.f32.gmra.mxu0 %v1407
        %v1481 = vpop.f32.mrf.mxu0
        %v1482 = vadd.f32 0.0, %v1481
        %v1483 = vpop.f32.mrf.mxu0
        %v1484 = vadd.f32 0.0, %v1483
        %1485 = vdwg.mxu0
        %1486 = vmatprep.subr.mxu0 0.0
        %1487 = vmatpush1.msra.mxu0 0.0
        %1488 = vmatprep.subr.mxu0 0.0
        %1489 = vmatpush1.msra.mxu0 0.0
        %1490 = vmatprep.subr.mxu0 0.0
        %1491 = vmatpush1.msra.mxu0 0.0
        %1492 = vmatprep.subr.mxu0 0.0
        %1493 = vmatpush1.msra.mxu0 0.0
        %1494 = vmatprep.subr.mxu0 0.0
        %1495 = vmatpush1.msra.mxu0 0.0
        %1496 = vmatprep.subr.mxu0 0.0
        %1497 = vmatpush1.msra.mxu0 0.0
        %1498 = vmatprep.subr.mxu0 0.0
        %1499 = vmatpush1.msra.mxu0 0.0
        %1500 = vmatprep.subr.mxu0 0.0
        %1501 = vmatpush1.msra.mxu0 0.0
        %1502 = vmatprep.subr.mxu0 0.0
        %1503 = vmatpush1.msra.mxu0 0.0
        %1504 = vmatprep.subr.mxu0 0.0
        %1505 = vmatpush1.msra.mxu0 0.0
        %1506 = vmatprep.subr.mxu0 0.0
        %1507 = vmatpush1.msra.mxu0 0.0
        %1508 = vmatprep.subr.mxu0 0.0
        %1509 = vmatpush1.msra.mxu0 0.0
        %1510 = vmatprep.subr.mxu0 0.0
        %1511 = vmatpush1.msra.mxu0 0.0
        %1512 = vmatprep.subr.mxu0 0.0
        %1513 = vmatpush1.msra.mxu0 0.0
        %1514 = vmatprep.subr.mxu0 0.0
        %1515 = vmatpush1.msra.mxu0 0.0
        %1516 = vmatprep.subr.mxu0 0.0
        %1517 = vmatpush1.msra.mxu0 %v1413
        %1518 = vmatprep.subr.mxu0 0.0
        %1519 = vmatpush2.msra.mxu0 0.0
        %1520 = vmatprep.subr.mxu0 0.0
        %1521 = vmatpush2.msra.mxu0 0.0
        %1522 = vmatprep.subr.mxu0 0.0
        %1523 = vmatpush2.msra.mxu0 0.0
        %1524 = vmatprep.subr.mxu0 0.0
        %1525 = vmatpush2.msra.mxu0 0.0
        %1526 = vmatprep.subr.mxu0 0.0
        %1527 = vmatpush2.msra.mxu0 0.0
        %1528 = vmatprep.subr.mxu0 0.0
        %1529 = vmatpush2.msra.mxu0 0.0
        %1530 = vmatprep.subr.mxu0 0.0
        %1531 = vmatpush2.msra.mxu0 0.0
        %1532 = vmatprep.subr.mxu0 0.0
        %1533 = vmatpush2.msra.mxu0 0.0
        %1534 = vmatprep.subr.mxu0 0.0
        %1535 = vmatpush2.msra.mxu0 0.0
        %1536 = vmatprep.subr.mxu0 0.0
        %1537 = vmatpush2.msra.mxu0 0.0
        %1538 = vmatprep.subr.mxu0 0.0
        %1539 = vmatpush2.msra.mxu0 0.0
        %1540 = vmatprep.subr.mxu0 0.0
        %1541 = vmatpush2.msra.mxu0 0.0
        %1542 = vmatprep.subr.mxu0 0.0
        %1543 = vmatpush2.msra.mxu0 0.0
        %1544 = vmatprep.subr.mxu0 0.0
        %1545 = vmatpush2.msra.mxu0 0.0
        %1546 = vmatprep.subr.mxu0 0.0
        %1547 = vmatpush2.msra.mxu0 0.0
        %1548 = vmatprep.subr.mxu0 0.0
        %1549 = vmatpush2.msra.mxu0 0.0
        %1550 = vmatprep.mubr.f32.mxu0 0.0
        %1551 = vmatmul.mubr.f32.gmra.mxu0 %v1407
        %v1552 = vpop.f32.mrf.mxu0
        %v1553 = vadd.f32 0.0, %v1552
        %v1554 = vpop.f32.mrf.mxu0
        %1555 = vdwg.mxu0
        %v1556 = vadd.f32 %v1387, %v1482
        %v1557 = vadd.f32 %v1388, %v1484
        %v1558 = vadd.f32 %v1389, %v1553
        %s1559 = scalar_lea.vmem %s224, 64
        %v1560 = vld [vmem:[%s1559] sm:$0xff]
        %v1561 = vld [vmem:[%s190] sm:$0xff]
        %v1562 = vld [vmem:[%s190 + $0x8] sm:$0xf]
        %v1565 = vcombine.high %v1561, %v1561
        %1566 = vrot.lane.b32.xlu0 %v1561, 90
        %v1567 = vpop.permute.xlu0 %1566
        %1568 = vrot.lane.b32.xlu0 %v1565, 90
        %v1569 = vpop.permute.xlu0 %1568
        %1570 = vrot.lane.b32.xlu0 %v1562, 90
        %v1571 = vpop.permute.xlu0 %1570
        %vm1572 = vcmask 736256
        %v1573 = vsel %vm1572, %v1567, %v1569
        %v1574 = vsel %vm1572, %v1569, %v1571
        %v1576 = vsel %vm243, %v1560, 0
        %v1578 = vsel %vm247, %v1573, 0
        %v1580 = vsel %vm247, %v1574, 0
        %v1582 = vsel %vm247, %v1571, 0
        %1584 = vmatprep.subr.mxu0 0.0
        %1585 = vmatpush1.msra.mxu0 0.0
        %1586 = vmatprep.subr.mxu0 0.0
        %1587 = vmatpush1.msra.mxu0 0.0
        %1588 = vmatprep.subr.mxu0 0.0
        %1589 = vmatpush1.msra.mxu0 0.0
        %1590 = vmatprep.subr.mxu0 0.0
        %1591 = vmatpush1.msra.mxu0 0.0
        %1592 = vmatprep.subr.mxu0 0.0
        %1593 = vmatpush1.msra.mxu0 0.0
        %1594 = vmatprep.subr.mxu0 0.0
        %1595 = vmatpush1.msra.mxu0 0.0
        %1596 = vmatprep.subr.mxu0 0.0
        %1597 = vmatpush1.msra.mxu0 0.0
        %1598 = vmatprep.subr.mxu0 0.0
        %1599 = vmatpush1.msra.mxu0 0.0
        %1600 = vmatprep.subr.mxu0 0.0
        %1601 = vmatpush1.msra.mxu0 0.0
        %1602 = vmatprep.subr.mxu0 0.0
        %1603 = vmatpush1.msra.mxu0 0.0
        %1604 = vmatprep.subr.mxu0 0.0
        %1605 = vmatpush1.msra.mxu0 0.0
        %1606 = vmatprep.subr.mxu0 0.0
        %1607 = vmatpush1.msra.mxu0 0.0
        %1608 = vmatprep.subr.mxu0 0.0
        %1609 = vmatpush1.msra.mxu0 0.0
        %1610 = vmatprep.subr.mxu0 0.0
        %1611 = vmatpush1.msra.mxu0 0.0
        %1612 = vmatprep.subr.mxu0 0.0
        %1613 = vmatpush1.msra.mxu0 0.0
        %1614 = vmatprep.subr.mxu0 %v1580
        %1615 = vmatpush1.msra.mxu0 %v1578
        %1616 = vmatprep.subr.mxu0 0.0
        %1617 = vmatpush2.msra.mxu0 0.0
        %1618 = vmatprep.subr.mxu0 0.0
        %1619 = vmatpush2.msra.mxu0 0.0
        %1620 = vmatprep.subr.mxu0 0.0
        %1621 = vmatpush2.msra.mxu0 0.0
        %1622 = vmatprep.subr.mxu0 0.0
        %1623 = vmatpush2.msra.mxu0 0.0
        %1624 = vmatprep.subr.mxu0 0.0
        %1625 = vmatpush2.msra.mxu0 0.0
        %1626 = vmatprep.subr.mxu0 0.0
        %1627 = vmatpush2.msra.mxu0 0.0
        %1628 = vmatprep.subr.mxu0 0.0
        %1629 = vmatpush2.msra.mxu0 0.0
        %1630 = vmatprep.subr.mxu0 0.0
        %1631 = vmatpush2.msra.mxu0 0.0
        %1632 = vmatprep.subr.mxu0 0.0
        %1633 = vmatpush2.msra.mxu0 0.0
        %1634 = vmatprep.subr.mxu0 0.0
        %1635 = vmatpush2.msra.mxu0 0.0
        %1636 = vmatprep.subr.mxu0 0.0
        %1637 = vmatpush2.msra.mxu0 0.0
        %1638 = vmatprep.subr.mxu0 0.0
        %1639 = vmatpush2.msra.mxu0 0.0
        %1640 = vmatprep.subr.mxu0 0.0
        %1641 = vmatpush2.msra.mxu0 0.0
        %1642 = vmatprep.subr.mxu0 0.0
        %1643 = vmatpush2.msra.mxu0 0.0
        %1644 = vmatprep.subr.mxu0 0.0
        %1645 = vmatpush2.msra.mxu0 0.0
        %1646 = vmatprep.subr.mxu0 0.0
        %1647 = vmatpush2.msra.mxu0 0.0
        %1648 = vmatprep.mubr.f32.mxu0 0.0
        %1649 = vmatmul.mubr.f32.gmra.mxu0 %v1576
        %v1650 = vpop.f32.mrf.mxu0
        %v1651 = vadd.f32 0.0, %v1650
        %v1652 = vpop.f32.mrf.mxu0
        %v1653 = vadd.f32 0.0, %v1652
        %1654 = vdwg.mxu0
        %1655 = vmatprep.subr.mxu0 0.0
        %1656 = vmatpush1.msra.mxu0 0.0
        %1657 = vmatprep.subr.mxu0 0.0
        %1658 = vmatpush1.msra.mxu0 0.0
        %1659 = vmatprep.subr.mxu0 0.0
        %1660 = vmatpush1.msra.mxu0 0.0
        %1661 = vmatprep.subr.mxu0 0.0
        %1662 = vmatpush1.msra.mxu0 0.0
        %1663 = vmatprep.subr.mxu0 0.0
        %1664 = vmatpush1.msra.mxu0 0.0
        %1665 = vmatprep.subr.mxu0 0.0
        %1666 = vmatpush1.msra.mxu0 0.0
        %1667 = vmatprep.subr.mxu0 0.0
        %1668 = vmatpush1.msra.mxu0 0.0
        %1669 = vmatprep.subr.mxu0 0.0
        %1670 = vmatpush1.msra.mxu0 0.0
        %1671 = vmatprep.subr.mxu0 0.0
        %1672 = vmatpush1.msra.mxu0 0.0
        %1673 = vmatprep.subr.mxu0 0.0
        %1674 = vmatpush1.msra.mxu0 0.0
        %1675 = vmatprep.subr.mxu0 0.0
        %1676 = vmatpush1.msra.mxu0 0.0
        %1677 = vmatprep.subr.mxu0 0.0
        %1678 = vmatpush1.msra.mxu0 0.0
        %1679 = vmatprep.subr.mxu0 0.0
        %1680 = vmatpush1.msra.mxu0 0.0
        %1681 = vmatprep.subr.mxu0 0.0
        %1682 = vmatpush1.msra.mxu0 0.0
        %1683 = vmatprep.subr.mxu0 0.0
        %1684 = vmatpush1.msra.mxu0 0.0
        %1685 = vmatprep.subr.mxu0 0.0
        %1686 = vmatpush1.msra.mxu0 %v1582
        %1687 = vmatprep.subr.mxu0 0.0
        %1688 = vmatpush2.msra.mxu0 0.0
        %1689 = vmatprep.subr.mxu0 0.0
        %1690 = vmatpush2.msra.mxu0 0.0
        %1691 = vmatprep.subr.mxu0 0.0
        %1692 = vmatpush2.msra.mxu0 0.0
        %1693 = vmatprep.subr.mxu0 0.0
        %1694 = vmatpush2.msra.mxu0 0.0
        %1695 = vmatprep.subr.mxu0 0.0
        %1696 = vmatpush2.msra.mxu0 0.0
        %1697 = vmatprep.subr.mxu0 0.0
        %1698 = vmatpush2.msra.mxu0 0.0
        %1699 = vmatprep.subr.mxu0 0.0
        %1700 = vmatpush2.msra.mxu0 0.0
        %1701 = vmatprep.subr.mxu0 0.0
        %1702 = vmatpush2.msra.mxu0 0.0
        %1703 = vmatprep.subr.mxu0 0.0
        %1704 = vmatpush2.msra.mxu0 0.0
        %1705 = vmatprep.subr.mxu0 0.0
        %1706 = vmatpush2.msra.mxu0 0.0
        %1707 = vmatprep.subr.mxu0 0.0
        %1708 = vmatpush2.msra.mxu0 0.0
        %1709 = vmatprep.subr.mxu0 0.0
        %1710 = vmatpush2.msra.mxu0 0.0
        %1711 = vmatprep.subr.mxu0 0.0
        %1712 = vmatpush2.msra.mxu0 0.0
        %1713 = vmatprep.subr.mxu0 0.0
        %1714 = vmatpush2.msra.mxu0 0.0
        %1715 = vmatprep.subr.mxu0 0.0
        %1716 = vmatpush2.msra.mxu0 0.0
        %1717 = vmatprep.subr.mxu0 0.0
        %1718 = vmatpush2.msra.mxu0 0.0
        %1719 = vmatprep.mubr.f32.mxu0 0.0
        %1720 = vmatmul.mubr.f32.gmra.mxu0 %v1576
        %v1721 = vpop.f32.mrf.mxu0
        %v1722 = vadd.f32 0.0, %v1721
        %v1723 = vpop.f32.mrf.mxu0
        %1724 = vdwg.mxu0
        %v1725 = vadd.f32 %v1556, %v1651
        %v1726 = vadd.f32 %v1557, %v1653
        %v1727 = vadd.f32 %v1558, %v1722
        %v1728 = vld [vmem:[%s4] sm:$0xff]
        %s1729 = sld [smem:[#allocation3 + %s32]]
        %s1730 = scvt.s32.f32 %s1729
        %v1731 = vstv %s1730
        %v1732 = vmul.f32 %v1728, %v1731
        %1734 = vset.pattern.permute.xlu0 0
        %1735 = vperm.xlu0 %1734, %v1732
        %v1736 = vpop.permute.xlu0 %1735
        %v1738 = vadd.f32 %v1725, %v1736
        %v1739 = vadd.f32 %v1726, %v1736
        %v1740 = vadd.f32 %v1727, %v1736
        %1741 = vst [vmem:[%s218] sm:$0xff] %v1738
        %1742 = vst [vmem:[%s218 + $0x8] sm:$0xff] %v1739
        %vm1743 = vcmask 244736
        %1744 = vst.msk [vmem:[%s218 + $0x10] sm:$0xff] %vm1743, %v1740
        %s1745 = sand.u32 %s115, 1
        %s1746 = scalar_lea.sflag [#allocation7], %s1745
        %s1747 = sand.u32 %s115, 1
        %s1748 = smul.addr %s1747, 24
        %s1749 = scalar_lea.vmem [#allocation8], %s1748
        // Predicated region
        $region37: #{tpu_custom_call.1} parent=31 // pred_check
          %p1750 = pneg %p125
        $region38: #{tpu_custom_call.1} parent=31 // pred_check_branch
          %1752 = sbr.rel (%p1750) target = $region40
        $region39: #{tpu_custom_call.1} parent=31 // pred_region
          %s1754 = ssub.s32 384, 384
          %1755 = vsyncadd %s1746, %s1754
          %s1756 = smul.addr %s32, 3
          %s1757 = smul.addr %s1756, 128
          %s1758 = scalar_lea.hbm %s5, %s1757
          %s1760 = sshll.u32 %s1749, 4
          %s1761 = int_to_ptr.vmem [resolvable:$true] %s1760
          %1763 = dma.vmem_to_hbm [thread:$0]  %s1761, 384, %s1758, %s1746
        $region40: #{tpu_custom_call.1} parent=31 // pred_fallthru
          _
      $region32: #{tpu_custom_call.1} parent=5 // pred_fallthru
        _
      %p1764 = scmp.le.s32.totalorder 2, %s27
      // Predicated region
      $region41: #{tpu_custom_call.1} parent=5 // pred_check
        %p1765 = pneg %p1764
      $region42: #{tpu_custom_call.1} parent=5 // pred_check_branch
        %1767 = sbr.rel (%p1765) target = $region44
      $region43: #{tpu_custom_call.1} parent=5 // pred_region
        %s1768 = ssub.s32 %s27, 2
        // Predicated region
        $region45: #{tpu_custom_call.1} parent=43 // pred_check
          %p1769 = pneg %p131
        $region46: #{tpu_custom_call.1} parent=43 // pred_check_branch
          %1771 = sbr.rel (%p1769) target = $region48
        $region47: #{tpu_custom_call.1} parent=43 // pred_region
          %s1772 = sand.u32 %s116, 1
          %s1773 = scalar_lea.sflag [#allocation7], %s1772
          %s1774 = sand.u32 %s116, 1
          %s1775 = smul.addr %s1774, 24
          %s1776 = scalar_lea.vmem [#allocation8], %s1775
          %1777 = dma.done %s1773, 384
        $region48: #{tpu_custom_call.1} parent=43 // pred_fallthru
          _
      $region44: #{tpu_custom_call.1} parent=5 // pred_fallthru
        _
    $region6: #{tpu_custom_call.1} parent=1 // loop_footer
      %s31 = sadd.s32 1, %s27
    $region7: #{tpu_custom_call.1} parent=1 // loop_footer_branch
      %26 = sbr.rel target = $region3
    $region8: #{tpu_custom_call.1} parent=1 // loop_exit
      _
    %1778 = vsyncpa [#allocation6], 1
    %s1779 = scalar_lea.sflag [#allocation6], 1
    %1780 = vsyncpa %s1779, 1
    %1781 = vsyncpa [#allocation7], 1
    %s1782 = scalar_lea.sflag [#allocation7], 1
    %1783 = vsyncpa %s1782, 1

</llo_original>
